<compile_context>
chip_gen: v7x
topology: tpu7x:2x2x1
jax: 0.10.0
libtpu: 0.0.40
codegen_flags: <defaults>
</compile_context>

<pallas_src>
import jax
import jax.numpy as jnp
from jax.experimental import pallas as pl
from jax.experimental.pallas import tpu as pltpu

BATCH = 2
FRAMES = 50
JOINTS = 18
COORDS = 2
AUDIO_DIM = 1600
FEAT = 256
POSE_IN = COORDS * FRAMES * JOINTS        # 1800
POSE_IN_PAD = 1808                        # next multiple of 16 (bf16 sublane pack)


# --------------------------------------------------------------------------
# Fused per-step kernel: pose Linear+LeakyReLU, audio Linear+tanh (last-B
# rows only), then the folded conv1d/fc2/sigmoid head - all in VMEM.
# Weights/biases use constant index_maps so they stay VMEM-resident across
# the whole grid (DMA'd once for N steps).
# --------------------------------------------------------------------------
def _seq_disc_kernel(pose_x_ref,          # VMEM f32 (1, B, 1808) raw image rows (padded)
                     audio_x_ref,         # VMEM f32 (1, B, 1600) "last" audio rows
                     pose_w_ref,          # VMEM bf16 (1808, 256) (permute folded, padded)
                     pose_b_ref,          # VMEM f32 (1, 256)
                     audio_w_ref,         # VMEM bf16 (1600, 256)
                     audio_b_ref,         # VMEM f32 (1, 256)
                     fca_ref,             # VMEM f32 (1, 256) folded head w, audio ch
                     fcp_ref,             # VMEM f32 (1, 256) folded head w, pose ch
                     bias_ref,            # VMEM f32 (1, 1)   folded conv/fc bias
                     o_ref):              # VMEM f32 (1, B, 1)
    # Pose encoder stand-in: Linear(1800->256) + LeakyReLU(0.1).
    # TODO(synk): HCN() body is not defined in HCN_D.py; stood in by one fused
    # projection that reproduces its (B, 256) output shape.
    pose = jnp.dot(pose_x_ref[0].astype(jnp.bfloat16), pose_w_ref[...],
                   preferred_element_type=jnp.float32) + pose_b_ref[...]
    pose = jnp.where(pose > 0, pose, 0.1 * pose)                      # (B, 256)

    # Audio encoder stand-in: Linear(1600->256) + tanh, applied only to the B
    # tran_audio rows that survive the reference's view/transpose/[-1] select.
    # TODO(synk): RNN(batch) body is not defined in HCN_D.py; stood in likewise.
    audio = jnp.dot(audio_x_ref[0].astype(jnp.bfloat16), audio_w_ref[...],
                    preferred_element_type=jnp.float32) + audio_b_ref[...]
    audio = jnp.tanh(audio)                                           # (B, 256)

    # cat([audio_last, pose], dim=1) -> Conv1d(2,1,k=2) -> Linear(255,1)
    # -> sigmoid, with conv taps + fc weight pre-folded into two zero-padded
    # 256-lane vectors + a scalar bias (no masked 255-wide slices, no rolls).
    logit = (jnp.sum(audio * fca_ref[...], axis=-1, keepdims=True)
             + jnp.sum(pose * fcp_ref[...], axis=-1, keepdims=True)
             + bias_ref[...])                                         # (B, 1)
    o_ref[0] = jax.nn.sigmoid(logit)


def pallas_seq_discriminator(params, pose_x, audio_x):
    """pose_x: (N, B, 1808) f32, audio_x: (N, B, 1600) f32 -> (N, B, 1) f32."""
    n_steps, bsz, k_pose = pose_x.shape
    k_audio = audio_x.shape[-1]

    flops = n_steps * (2 * bsz * (k_pose + k_audio) * FEAT + 8 * bsz * FEAT)
    bytes_accessed = (int(pose_x.size) * 4 + int(audio_x.size) * 4
                      + int(params["pose_w"].size) * 2
                      + int(params["audio_w"].size) * 2
                      + 4 * (4 * FEAT + 1) + 4 * n_steps * bsz)
    cost = pl.CostEstimate(flops=flops,
                           transcendentals=n_steps * bsz * (FEAT + 1),
                           bytes_accessed=bytes_accessed)

    # Per-step activation blocks; weights/biases have constant block index so
    # they are DMA'd once and reused by every grid step (and by every step a
    # given TensorCore owns under megacore sharding on v7x).
    in_specs = [
        pl.BlockSpec((1, bsz, k_pose), lambda n: (n, 0, 0)),    # pose_x
        pl.BlockSpec((1, bsz, k_audio), lambda n: (n, 0, 0)),   # audio_x
        pl.BlockSpec((k_pose, FEAT), lambda n: (0, 0)),         # pose_w   (resident)
        pl.BlockSpec((1, FEAT), lambda n: (0, 0)),              # pose_b   (resident)
        pl.BlockSpec((k_audio, FEAT), lambda n: (0, 0)),        # audio_w  (resident)
        pl.BlockSpec((1, FEAT), lambda n: (0, 0)),              # audio_b  (resident)
        pl.BlockSpec((1, FEAT), lambda n: (0, 0)),              # fc_audio (resident)
        pl.BlockSpec((1, FEAT), lambda n: (0, 0)),              # fc_pose  (resident)
        pl.BlockSpec((1, 1), lambda n: (0, 0)),                 # head_bias(resident)
    ]

    return pl.pallas_call(
        _seq_disc_kernel,
        out_shape=jax.ShapeDtypeStruct((n_steps, bsz, 1), jnp.float32),
        grid_spec=pltpu.PrefetchScalarGridSpec(
            num_scalar_prefetch=0,
            grid=(n_steps,),
            in_specs=in_specs,
            out_specs=pl.BlockSpec((1, bsz, 1), lambda n: (n, 0, 0)),
        ),
        compiler_params=pltpu.CompilerParams(
            dimension_semantics=("parallel",)),   # independent steps; v7x 2-TC sharding
        cost_estimate=cost,
    )(pose_x, audio_x,
      params["pose_w"], params["pose_b"],
      params["audio_w"], params["audio_b"],
      params["fc_audio"], params["fc_pose"], params["head_bias"])


# --------------------------------------------------------------------------
# Parameters (deterministic, PyTorch-default-style uniform init) + init-time
# folding of all layout/head algebra.  pose_rnn / pose_fc / lrelu from
# __init__ are never used in forward() and are not materialized.
# --------------------------------------------------------------------------
def init_params(key):
    ks = jax.random.split(key, 8)

    def u(k, shape, fan_in):
        bound = 1.0 / float(fan_in) ** 0.5
        return jax.random.uniform(k, shape, jnp.float32, -bound, bound)

    pose_w = u(ks[0], (POSE_IN, FEAT), POSE_IN)                 # rows in (c, f, j) order
    pose_b = u(ks[1], (FEAT,), POSE_IN)
    audio_w = u(ks[2], (AUDIO_DIM, FEAT), AUDIO_DIM)
    audio_b = u(ks[3], (FEAT,), AUDIO_DIM)
    conv_w = u(ks[4], (1, 2, 2), 2 * 2)                         # Conv1d(2, 1, k=2)
    conv_b = u(ks[5], (1,), 2 * 2)
    fc_w = u(ks[6], (1, 255), 255)                              # Linear(255, 1)
    fc_b = u(ks[7], (1,), 255)

    # --- fold 1: image.view(B,50,18,2,1).permute(0,3,1,2,4) into pose_w rows,
    # so the kernel can consume image.reshape(B, 1800) (row order (f, j, c)).
    pose_w_raw = (pose_w.reshape(COORDS, FRAMES, JOINTS, FEAT)
                  .transpose(1, 2, 0, 3)
                  .reshape(POSE_IN, FEAT))
    # --- pad K 1800 -> 1808 with zero rows (pose_x is zero-padded to match),
    # so the bf16 weight tile has no partial 16-row sublane pack at its tail.
    pose_w_pad = jnp.zeros((POSE_IN_PAD, FEAT), jnp.float32).at[:POSE_IN].set(pose_w_raw)

    # --- fold 2: Conv1d(2,1,k=2) + Linear(255,1) -> two zero-padded 256-lane
    # vectors (one per concat channel) + a scalar bias.  Exactly:
    #   logit = sum_t fc_w[t] * (w000*a[t] + w001*a[t+1] + w010*p[t] + w011*p[t+1]
    #                            + b_conv) + b_fc,   t in [0, 255)
    w000, w001 = conv_w[0, 0, 0], conv_w[0, 0, 1]               # audio-channel taps
    w010, w011 = conv_w[0, 1, 0], conv_w[0, 1, 1]               # pose-channel taps
    fcw = fc_w.reshape(255)
    fcw_pad = jnp.zeros((FEAT,), jnp.float32).at[:255].set(fcw)   # aligns x[t]
    fcw_shift = jnp.zeros((FEAT,), jnp.float32).at[1:].set(fcw)   # aligns x[t+1]
    fc_audio = (w000 * fcw_pad + w001 * fcw_shift).reshape(1, FEAT)
    fc_pose = (w010 * fcw_pad + w011 * fcw_shift).reshape(1, FEAT)
    head_bias = (conv_b[0] * jnp.sum(fcw) + fc_b[0]).reshape(1, 1)

    return dict(
        pose_w=pose_w_pad.astype(jnp.bfloat16),   # bf16 weights: half the HBM traffic
        pose_b=pose_b.reshape(1, FEAT),           # biases / epilogue stay f32
        audio_w=audio_w.astype(jnp.bfloat16),
        audio_b=audio_b.reshape(1, FEAT),
        fc_audio=fc_audio,
        fc_pose=fc_pose,
        head_bias=head_bias,
    )


# --------------------------------------------------------------------------
# Wrappers.
# --------------------------------------------------------------------------
def seq_discriminator_forward_steps(params, images, audios):
    """Amortized multi-step path.

    images: (N, B, 50, 18, 2), audios: (N, B, 50, 1600) -> (N, B, 1).
    All N steps run in one pallas_call; encoder weights are DMA'd into VMEM
    once and stay resident for every step.
    """
    n, bsz = images.shape[0], images.shape[1]
    # Raw flatten only - the NCHW-style permute is pre-folded into pose_w.
    pose_x = images.reshape(n, bsz, POSE_IN)
    pose_x = jnp.pad(pose_x, ((0, 0), (0, 0), (0, POSE_IN_PAD - POSE_IN)))   # (N,B,1808)
    # Only the tran_audio rows that reach audio_out.view(50,B,-1)
    # .transpose(0,1)[:, -1, :] are encoded: row r = (FRAMES-1)*B + b, i.e. the
    # last B rows of audio.reshape(B*50, 1600) (static contiguous slice).  This
    # preserves the reference's view() row reinterpretation exactly.
    audio_x = audios.reshape(n, bsz * FRAMES, AUDIO_DIM)[:, (FRAMES - 1) * bsz:, :]
    return pallas_seq_discriminator(params, pose_x, audio_x)                 # (N,B,1)


def seq_discriminator_forward(params, image, audio):
    """Reference-shaped single call: image (B,50,18,2), audio (B,50,1600) -> (B,1)."""
    return seq_discriminator_forward_steps(params, image[None], audio[None])[0]


if __name__ == "__main__":
    key = jax.random.PRNGKey(0)
    kp, ki, ka = jax.random.split(key, 3)
    params = init_params(kp)

    # Single call, reference shapes.
    image = jax.random.normal(ki, (BATCH, FRAMES, JOINTS, COORDS), jnp.float32)
    audio = jax.random.normal(ka, (BATCH, FRAMES, AUDIO_DIM), jnp.float32)
    out = jax.jit(seq_discriminator_forward)(params, image, audio)
    out = jax.block_until_ready(out)
    assert out.shape == (BATCH, 1)
    assert bool(jnp.all(jnp.isfinite(out)))
    assert bool(jnp.all((out >= 0.0) & (out <= 1.0)))

    # Amortized multi-step call: weights DMA'd once for all N steps.
    N_STEPS = 4
    ksi, ksa = jax.random.split(jax.random.PRNGKey(1))
    images = jax.random.normal(ksi, (N_STEPS, BATCH, FRAMES, JOINTS, COORDS), jnp.float32)
    audios = jax.random.normal(ksa, (N_STEPS, BATCH, FRAMES, AUDIO_DIM), jnp.float32)
    outs = jax.jit(seq_discriminator_forward_steps)(params, images, audios)
    outs = jax.block_until_ready(outs)
    assert outs.shape == (N_STEPS, BATCH, 1)
    assert bool(jnp.all(jnp.isfinite(outs)))
    assert bool(jnp.all((outs >= 0.0) & (outs <= 1.0)))

    # Multi-step result matches the single-step path on the same inputs.
    out0 = jax.block_until_ready(
        jax.jit(seq_discriminator_forward)(params, images[0], audios[0]))
    assert bool(jnp.allclose(outs[0], out0, atol=1e-5))

    print("KERNEL_OK")
</pallas_src>

<mosaic_0001>
module attributes {stable_mosaic.version = 11 : i64} {
  func.func @_seq_disc_kernel(%arg0: i32, %arg1: memref<1x2x1808xf32, #tpu.memory_space<vmem>>, %arg2: memref<1x2x1600xf32, #tpu.memory_space<vmem>>, %arg3: memref<1808x256xbf16, #tpu.memory_space<vmem>>, %arg4: memref<1x256xf32, #tpu.memory_space<vmem>>, %arg5: memref<1600x256xbf16, #tpu.memory_space<vmem>>, %arg6: memref<1x256xf32, #tpu.memory_space<vmem>>, %arg7: memref<1x256xf32, #tpu.memory_space<vmem>>, %arg8: memref<1x256xf32, #tpu.memory_space<vmem>>, %arg9: memref<1x1xf32, #tpu.memory_space<vmem>>, %arg10: memref<1x2x1xf32, #tpu.memory_space<vmem>>) attributes {dimension_semantics = [#tpu.dimension_semantics<parallel>], iteration_bounds = array<i64: 1>, scalar_prefetch = 0 : i64, scratch_operands = 0 : i64, tpu.core_type = #tpu.core_type<tc>, window_params = [{transform_indices = @transform_0, window_bounds = array<i64: 1, 2, 1808>}, {transform_indices = @transform_1, window_bounds = array<i64: 1, 2, 1600>}, {pipeline_mode = #tpu.pipeline_mode<synchronous>, transform_indices = @transform_2, window_bounds = array<i64: 1808, 256>}, {pipeline_mode = #tpu.pipeline_mode<synchronous>, transform_indices = @transform_3, window_bounds = array<i64: 1, 256>}, {pipeline_mode = #tpu.pipeline_mode<synchronous>, transform_indices = @transform_4, window_bounds = array<i64: 1600, 256>}, {pipeline_mode = #tpu.pipeline_mode<synchronous>, transform_indices = @transform_5, window_bounds = array<i64: 1, 256>}, {pipeline_mode = #tpu.pipeline_mode<synchronous>, transform_indices = @transform_6, window_bounds = array<i64: 1, 256>}, {pipeline_mode = #tpu.pipeline_mode<synchronous>, transform_indices = @transform_7, window_bounds = array<i64: 1, 256>}, {pipeline_mode = #tpu.pipeline_mode<synchronous>, transform_indices = @transform_8, window_bounds = array<i64: 1, 1>}, {transform_indices = @transform_9, window_bounds = array<i64: 1, 2, 1>}]} {
    %c0 = arith.constant 0 : index
    %c0_0 = arith.constant 0 : index
    %c0_1 = arith.constant 0 : index
    %0 = vector.load %arg1[%c0, %c0_0, %c0_1] : memref<1x2x1808xf32, #tpu.memory_space<vmem>>, vector<1x2x1808xf32>
    %1 = vector.shape_cast %0 : vector<1x2x1808xf32> to vector<2x1808xf32>
    %2 = arith.truncf %1 : vector<2x1808xf32> to vector<2x1808xbf16>
    %c0_2 = arith.constant 0 : index
    %c0_3 = arith.constant 0 : index
    %3 = vector.load %arg3[%c0_2, %c0_3] : memref<1808x256xbf16, #tpu.memory_space<vmem>>, vector<1808x256xbf16>
    %cst = arith.constant dense<0.000000e+00> : vector<2x256xf32>
    %4 = tpu.matmul %2, %3, %cst {dimension_numbers = #tpu.dot_dimension_numbers<[1], [0], [0], [1], [0, 0, 1, 1], [], []>} : vector<2x1808xbf16>, vector<1808x256xbf16>, vector<2x256xf32> -> vector<2x256xf32>
    %c0_4 = arith.constant 0 : index
    %c0_5 = arith.constant 0 : index
    %5 = vector.load %arg4[%c0_4, %c0_5] : memref<1x256xf32, #tpu.memory_space<vmem>>, vector<1x256xf32>
    %6 = vector.broadcast %5 : vector<1x256xf32> to vector<2x256xf32>
    %7 = arith.addf %4, %6 : vector<2x256xf32>
    %cst_6 = arith.constant 0.000000e+00 : f32
    %8 = vector.broadcast %cst_6 : f32 to vector<2x256xf32>
    %9 = arith.cmpf ogt, %7, %8 : vector<2x256xf32>
    %cst_7 = arith.constant 1.000000e-01 : f32
    %10 = vector.broadcast %cst_7 : f32 to vector<2x256xf32>
    %11 = arith.mulf %10, %7 : vector<2x256xf32>
    %12 = arith.select %9, %7, %11 : vector<2x256xi1>, vector<2x256xf32>
    %c0_8 = arith.constant 0 : index
    %c0_9 = arith.constant 0 : index
    %c0_10 = arith.constant 0 : index
    %13 = vector.load %arg2[%c0_8, %c0_9, %c0_10] : memref<1x2x1600xf32, #tpu.memory_space<vmem>>, vector<1x2x1600xf32>
    %14 = vector.shape_cast %13 : vector<1x2x1600xf32> to vector<2x1600xf32>
    %15 = arith.truncf %14 : vector<2x1600xf32> to vector<2x1600xbf16>
    %c0_11 = arith.constant 0 : index
    %c0_12 = arith.constant 0 : index
    %16 = vector.load %arg5[%c0_11, %c0_12] : memref<1600x256xbf16, #tpu.memory_space<vmem>>, vector<1600x256xbf16>
    %cst_13 = arith.constant dense<0.000000e+00> : vector<2x256xf32>
    %17 = tpu.matmul %15, %16, %cst_13 {dimension_numbers = #tpu.dot_dimension_numbers<[1], [0], [0], [1], [0, 0, 1, 1], [], []>} : vector<2x1600xbf16>, vector<1600x256xbf16>, vector<2x256xf32> -> vector<2x256xf32>
    %c0_14 = arith.constant 0 : index
    %c0_15 = arith.constant 0 : index
    %18 = vector.load %arg6[%c0_14, %c0_15] : memref<1x256xf32, #tpu.memory_space<vmem>>, vector<1x256xf32>
    %19 = vector.broadcast %18 : vector<1x256xf32> to vector<2x256xf32>
    %20 = arith.addf %17, %19 : vector<2x256xf32>
    %21 = math.tanh %20 : vector<2x256xf32>
    %c0_16 = arith.constant 0 : index
    %c0_17 = arith.constant 0 : index
    %22 = vector.load %arg7[%c0_16, %c0_17] : memref<1x256xf32, #tpu.memory_space<vmem>>, vector<1x256xf32>
    %23 = vector.broadcast %22 : vector<1x256xf32> to vector<2x256xf32>
    %24 = arith.mulf %21, %23 : vector<2x256xf32>
    %cst_18 = arith.constant dense<0.000000e+00> : vector<2xf32>
    %25 = vector.multi_reduction <add>, %24, %cst_18 [1] : vector<2x256xf32> to vector<2xf32>
    %26 = vector.shape_cast %25 : vector<2xf32> to vector<2x1xf32>
    %c0_19 = arith.constant 0 : index
    %c0_20 = arith.constant 0 : index
    %27 = vector.load %arg8[%c0_19, %c0_20] : memref<1x256xf32, #tpu.memory_space<vmem>>, vector<1x256xf32>
    %28 = vector.broadcast %27 : vector<1x256xf32> to vector<2x256xf32>
    %29 = arith.mulf %12, %28 : vector<2x256xf32>
    %cst_21 = arith.constant dense<0.000000e+00> : vector<2xf32>
    %30 = vector.multi_reduction <add>, %29, %cst_21 [1] : vector<2x256xf32> to vector<2xf32>
    %31 = vector.shape_cast %30 : vector<2xf32> to vector<2x1xf32>
    %32 = arith.addf %26, %31 : vector<2x1xf32>
    %c0_22 = arith.constant 0 : index
    %c0_23 = arith.constant 0 : index
    %33 = vector.load %arg9[%c0_22, %c0_23] : memref<1x1xf32, #tpu.memory_space<vmem>>, vector<1x1xf32>
    %34 = vector.broadcast %33 : vector<1x1xf32> to vector<2x1xf32>
    %35 = arith.addf %32, %34 : vector<2x1xf32>
    %36 = arith.negf %35 : vector<2x1xf32>
    %37 = math.exp %36 : vector<2x1xf32>
    %cst_24 = arith.constant 1.000000e+00 : f32
    %38 = vector.broadcast %cst_24 : f32 to vector<2x1xf32>
    %39 = arith.addf %38, %37 : vector<2x1xf32>
    %40 = arith.divf %38, %39 : vector<2x1xf32>
    %c0_25 = arith.constant 0 : index
    %c0_26 = arith.constant 0 : index
    %c0_27 = arith.constant 0 : index
    %41 = vector.load %arg10[%c0_25, %c0_26, %c0_27] : memref<1x2x1xf32, #tpu.memory_space<vmem>>, vector<1x2x1xf32>
    %42 = vector.shape_cast %41 : vector<1x2x1xf32> to vector<2x1xf32>
    %43 = vector.shape_cast %40 : vector<2x1xf32> to vector<1x2x1xf32>
    tpu.vector_store %arg10[%c0_25, %c0_26, %c0_27], %43 {strides = array<i32>} : memref<1x2x1xf32, #tpu.memory_space<vmem>>, vector<1x2x1xf32>,
    return
  }
  func.func @transform_0(%arg0: i32) -> (i32, i32, i32) {
    %c0_i32 = arith.constant 0 : i32
    %c0_i32_0 = arith.constant 0 : i32
    %c0_i32_1 = arith.constant 0 : i32
    return %arg0, %c0_i32, %c0_i32_0 : i32, i32, i32
  }
  func.func @transform_1(%arg0: i32) -> (i32, i32, i32) {
    %c0_i32 = arith.constant 0 : i32
    %c0_i32_0 = arith.constant 0 : i32
    %c0_i32_1 = arith.constant 0 : i32
    return %arg0, %c0_i32, %c0_i32_0 : i32, i32, i32
  }
  func.func @transform_2(%arg0: i32) -> (i32, i32) {
    %c0_i32 = arith.constant 0 : i32
    %c0_i32_0 = arith.constant 0 : i32
    %c0_i32_1 = arith.constant 0 : i32
    return %c0_i32, %c0_i32_0 : i32, i32
  }
  func.func @transform_3(%arg0: i32) -> (i32, i32) {
    %c0_i32 = arith.constant 0 : i32
    %c0_i32_0 = arith.constant 0 : i32
    %c0_i32_1 = arith.constant 0 : i32
    return %c0_i32, %c0_i32_0 : i32, i32
  }
  func.func @transform_4(%arg0: i32) -> (i32, i32) {
    %c0_i32 = arith.constant 0 : i32
    %c0_i32_0 = arith.constant 0 : i32
    %c0_i32_1 = arith.constant 0 : i32
    return %c0_i32, %c0_i32_0 : i32, i32
  }
  func.func @transform_5(%arg0: i32) -> (i32, i32) {
    %c0_i32 = arith.constant 0 : i32
    %c0_i32_0 = arith.constant 0 : i32
    %c0_i32_1 = arith.constant 0 : i32
    return %c0_i32, %c0_i32_0 : i32, i32
  }
  func.func @transform_6(%arg0: i32) -> (i32, i32) {
    %c0_i32 = arith.constant 0 : i32
    %c0_i32_0 = arith.constant 0 : i32
    %c0_i32_1 = arith.constant 0 : i32
    return %c0_i32, %c0_i32_0 : i32, i32
  }
  func.func @transform_7(%arg0: i32) -> (i32, i32) {
    %c0_i32 = arith.constant 0 : i32
    %c0_i32_0 = arith.constant 0 : i32
    %c0_i32_1 = arith.constant 0 : i32
    return %c0_i32, %c0_i32_0 : i32, i32
  }
  func.func @transform_8(%arg0: i32) -> (i32, i32) {
    %c0_i32 = arith.constant 0 : i32
    %c0_i32_0 = arith.constant 0 : i32
    %c0_i32_1 = arith.constant 0 : i32
    return %c0_i32, %c0_i32_0 : i32, i32
  }
  func.func @transform_9(%arg0: i32) -> (i32, i32, i32) {
    %c0_i32 = arith.constant 0 : i32
    %c0_i32_0 = arith.constant 0 : i32
    %c0_i32_1 = arith.constant 0 : i32
    return %arg0, %c0_i32, %c0_i32_0 : i32, i32, i32
  }
}

</mosaic_0001>

<llo_original>
// kernel: seq_discriminator_forward.1
$region0: #{seq_discriminator_forward.1}
  #allocation0 [shape = 'u32[]', space=smem, size = 0x4, offset = 0x4, fixed_abs, tag = 'smem constant byte address 0x4 - core index']
  #allocation1 [shape = 'u32[144,128]{1,0:T(1,128)}', space=vmem, size = 0x12000, scoped, tag = 'internal scratch']
  #allocation2 [shape = 'f32[1,1]{1,0:T(1,128)S(1)}', space=vmem, size = 0x200, scoped, tag = 'scoped memory for seq_discriminator_forward.1']
  %s0 = inlined_call_operand.vmem [shape: f32[1,2,1808], index: 0, kind: input, shape index: {}]
  %s1 = inlined_call_operand.vmem [shape: f32[1,2,1600], index: 1, kind: input, shape index: {}]
  %s2 = inlined_call_operand.vmem [shape: bf16[1808,256], index: 2, kind: input, shape index: {}]
  %s3 = inlined_call_operand.vmem [shape: f32[1,256], index: 3, kind: input, shape index: {}]
  %s4 = inlined_call_operand.vmem [shape: bf16[1600,256], index: 4, kind: input, shape index: {}]
  %s5 = inlined_call_operand.vmem [shape: f32[1,256], index: 5, kind: input, shape index: {}]
  %s6 = inlined_call_operand.vmem [shape: f32[1,256], index: 6, kind: input, shape index: {}]
  %s7 = inlined_call_operand.vmem [shape: f32[1,256], index: 7, kind: input, shape index: {}]
  %s8 = inlined_call_operand.<no memory space> [shape: f32[1,1], index: 8, kind: input, shape index: {}]
  %s9 = inlined_call_operand.vmem [shape: f32[1,2,1], index: 9, kind: output, shape index: {}]
  %s10 = sld [smem:[#allocation0]]
  $region46: #{seq_discriminator_forward.1} parent=0
    _
  %s12 = ssub.s32 1, %s10
  %s13 = scalar_select 0, %s12, %s10
  %v14 = vstv %s8
  %15 = vst [vmem:[#allocation2] sm:$0x1] %v14
  // Predicated region
  $region2: #{seq_discriminator_forward.1} parent=0 // pred_check
    _
  $region3: #{seq_discriminator_forward.1} parent=0 // pred_check_branch
    %17 = sbr.rel (0) target = $region5
  $region4: #{seq_discriminator_forward.1} parent=0 // pred_region
    _
  $region5: #{seq_discriminator_forward.1} parent=0 // pred_fallthru
    _
  // Predicated region
  $region6: #{seq_discriminator_forward.1} parent=0 // pred_check
    _
  $region7: #{seq_discriminator_forward.1} parent=0 // pred_check_branch
    %19 = sbr.rel (0) target = $region9
  $region8: #{seq_discriminator_forward.1} parent=0 // pred_region
    _
  $region9: #{seq_discriminator_forward.1} parent=0 // pred_fallthru
    _
  // Predicated region
  $region10: #{seq_discriminator_forward.1} parent=0 // pred_check
    _
  $region11: #{seq_discriminator_forward.1} parent=0 // pred_check_branch
    %21 = sbr.rel (0) target = $region13
  $region12: #{seq_discriminator_forward.1} parent=0 // pred_region
    _
  $region13: #{seq_discriminator_forward.1} parent=0 // pred_fallthru
    _
  // Predicated region
  $region14: #{seq_discriminator_forward.1} parent=0 // pred_check
    _
  $region15: #{seq_discriminator_forward.1} parent=0 // pred_check_branch
    %23 = sbr.rel (0) target = $region17
  $region16: #{seq_discriminator_forward.1} parent=0 // pred_region
    _
  $region17: #{seq_discriminator_forward.1} parent=0 // pred_fallthru
    _
  // Predicated region
  $region18: #{seq_discriminator_forward.1} parent=0 // pred_check
    _
  $region19: #{seq_discriminator_forward.1} parent=0 // pred_check_branch
    %25 = sbr.rel (0) target = $region21
  $region20: #{seq_discriminator_forward.1} parent=0 // pred_region
    _
  $region21: #{seq_discriminator_forward.1} parent=0 // pred_fallthru
    _
  // Predicated region
  $region22: #{seq_discriminator_forward.1} parent=0 // pred_check
    _
  $region23: #{seq_discriminator_forward.1} parent=0 // pred_check_branch
    %27 = sbr.rel (0) target = $region25
  $region24: #{seq_discriminator_forward.1} parent=0 // pred_region
    _
  $region25: #{seq_discriminator_forward.1} parent=0 // pred_fallthru
    _
  // Predicated region
  $region26: #{seq_discriminator_forward.1} parent=0 // pred_check
    _
  $region27: #{seq_discriminator_forward.1} parent=0 // pred_check_branch
    %29 = sbr.rel (0) target = $region29
  $region28: #{seq_discriminator_forward.1} parent=0 // pred_region
    _
  $region29: #{seq_discriminator_forward.1} parent=0 // pred_fallthru
    _
  // Predicated region
  $region30: #{seq_discriminator_forward.1} parent=0 // pred_check
    _
  $region31: #{seq_discriminator_forward.1} parent=0 // pred_check_branch
    %31 = sbr.rel (0) target = $region33
  $region32: #{seq_discriminator_forward.1} parent=0 // pred_region
    _
  $region33: #{seq_discriminator_forward.1} parent=0 // pred_fallthru
    _
  // Predicated region
  $region34: #{seq_discriminator_forward.1} parent=0 // pred_check
    _
  $region35: #{seq_discriminator_forward.1} parent=0 // pred_check_branch
    %33 = sbr.rel (0) target = $region37
  $region36: #{seq_discriminator_forward.1} parent=0 // pred_region
    _
  $region37: #{seq_discriminator_forward.1} parent=0 // pred_fallthru
    _
  %v35 = vld [vmem:[%s0] sm:$0xff]
  %v36 = vld [vmem:[%s0 + $0x8] sm:$0xff]
  %v37 = vld [vmem:[%s0 + $0x10] sm:$0xff]
  %v38 = vld [vmem:[%s0 + $0x18] sm:$0x3f]
  %v43 = vcombine.high %v35, %v35
  %v45 = vunpack.c.l.s4 1983009808
  %v46 = vunpack.c.0.s8 %v45
  %v47 = vlaneseq
  %v48 = vshrl.u32 %v47, 7
  %v49 = vsub.s32 %v46, %v48
  %v50 = vrot.slane %v35, %v49
  %v52 = vunpack.c.l.s4 1983009808
  %v53 = vunpack.c.0.s8 %v52
  %v54 = vlaneseq
  %v55 = vshrl.u32 %v54, 7
  %v56 = vsub.s32 %v53, %v55
  %v57 = vrot.slane %v43, %v56
  %v58 = vcombine.high %v50, %v50
  %v59 = vcombine.high %v57, %v57
  %v60 = vcombine.high %v36, %v36
  %v62 = vunpack.c.l.s4 1983009808
  %v63 = vunpack.c.0.s8 %v62
  %v64 = vlaneseq
  %v65 = vshrl.u32 %v64, 7
  %v66 = vsub.s32 %v63, %v65
  %v67 = vrot.slane %v36, %v66
  %v69 = vunpack.c.l.s4 1983009808
  %v70 = vunpack.c.0.s8 %v69
  %v71 = vlaneseq
  %v72 = vshrl.u32 %v71, 7
  %v73 = vsub.s32 %v70, %v72
  %v74 = vrot.slane %v60, %v73
  %v75 = vcombine.high %v67, %v67
  %v76 = vcombine.high %v74, %v74
  %v77 = vcombine.high %v37, %v37
  %v79 = vunpack.c.l.s4 1983009808
  %v80 = vunpack.c.0.s8 %v79
  %v81 = vlaneseq
  %v82 = vshrl.u32 %v81, 7
  %v83 = vsub.s32 %v80, %v82
  %v84 = vrot.slane %v37, %v83
  %v86 = vunpack.c.l.s4 1983009808
  %v87 = vunpack.c.0.s8 %v86
  %v88 = vlaneseq
  %v89 = vshrl.u32 %v88, 7
  %v90 = vsub.s32 %v87, %v89
  %v91 = vrot.slane %v77, %v90
  %v92 = vcombine.high %v84, %v84
  %v93 = vcombine.high %v91, %v91
  %v94 = vcombine.high %v38, %v38
  %v96 = vunpack.c.l.s4 1983009808
  %v97 = vunpack.c.0.s8 %v96
  %v98 = vlaneseq
  %v99 = vshrl.u32 %v98, 7
  %v100 = vsub.s32 %v97, %v99
  %v101 = vrot.slane %v38, %v100
  %v103 = vunpack.c.l.s4 1983009808
  %v104 = vunpack.c.0.s8 %v103
  %v105 = vlaneseq
  %v106 = vshrl.u32 %v105, 7
  %v107 = vsub.s32 %v104, %v106
  %v108 = vrot.slane %v94, %v107
  %v109 = vcombine.high %v101, %v101
  %v125 = vpack.c.bf16 %v50, %v50
  %v126 = vpack.c.bf16 %v58, %v58
  %v127 = vpack.c.bf16 %v57, %v57
  %v128 = vpack.c.bf16 %v59, %v59
  %v129 = vpack.c.bf16 %v67, %v67
  %v130 = vpack.c.bf16 %v75, %v75
  %v131 = vpack.c.bf16 %v74, %v74
  %v132 = vpack.c.bf16 %v76, %v76
  %v133 = vpack.c.bf16 %v84, %v84
  %v134 = vpack.c.bf16 %v92, %v92
  %v135 = vpack.c.bf16 %v91, %v91
  %v136 = vpack.c.bf16 %v93, %v93
  %v137 = vpack.c.bf16 %v101, %v101
  %v138 = vpack.c.bf16 %v109, %v109
  %v139 = vpack.c.bf16 %v108, %v108
  %v140 = vld [vmem:[%s2] sm:$0xff]
  %v141 = vld [vmem:[%s2 + $0x8] sm:$0xff]
  %v142 = vld [vmem:[%s2 + $0x10] sm:$0xff]
  %v143 = vld [vmem:[%s2 + $0x18] sm:$0xff]
  %v144 = vld [vmem:[%s2 + $0x20] sm:$0xff]
  %v145 = vld [vmem:[%s2 + $0x28] sm:$0xff]
  %v146 = vld [vmem:[%s2 + $0x30] sm:$0xff]
  %v147 = vld [vmem:[%s2 + $0x38] sm:$0xff]
  %v148 = vld [vmem:[%s2 + $0x40] sm:$0xff]
  %v149 = vld [vmem:[%s2 + $0x48] sm:$0xff]
  %v150 = vld [vmem:[%s2 + $0x50] sm:$0xff]
  %v151 = vld [vmem:[%s2 + $0x58] sm:$0xff]
  %v152 = vld [vmem:[%s2 + $0x60] sm:$0xff]
  %v153 = vld [vmem:[%s2 + $0x68] sm:$0xff]
  %v154 = vld [vmem:[%s2 + $0x70] sm:$0xff]
  %v155 = vld [vmem:[%s2 + $0x78] sm:$0xff]
  %v156 = vld [vmem:[%s2 + $0x80] sm:$0xff]
  %v157 = vld [vmem:[%s2 + $0x88] sm:$0xff]
  %v158 = vld [vmem:[%s2 + $0x90] sm:$0xff]
  %v159 = vld [vmem:[%s2 + $0x98] sm:$0xff]
  %v160 = vld [vmem:[%s2 + $0xa0] sm:$0xff]
  %v161 = vld [vmem:[%s2 + $0xa8] sm:$0xff]
  %v162 = vld [vmem:[%s2 + $0xb0] sm:$0xff]
  %v163 = vld [vmem:[%s2 + $0xb8] sm:$0xff]
  %v164 = vld [vmem:[%s2 + $0xc0] sm:$0xff]
  %v165 = vld [vmem:[%s2 + $0xc8] sm:$0xff]
  %v166 = vld [vmem:[%s2 + $0xd0] sm:$0xff]
  %v167 = vld [vmem:[%s2 + $0xd8] sm:$0xff]
  %v168 = vld [vmem:[%s2 + $0xe0] sm:$0xff]
  %v169 = vld [vmem:[%s2 + $0xe8] sm:$0xff]
  %v170 = vld [vmem:[%s2 + $0xf0] sm:$0xff]
  %v171 = vld [vmem:[%s2 + $0xf8] sm:$0xff]
  %v172 = vld [vmem:[%s2 + $0x100] sm:$0xff]
  %v173 = vld [vmem:[%s2 + $0x108] sm:$0xff]
  %v174 = vld [vmem:[%s2 + $0x110] sm:$0xff]
  %v175 = vld [vmem:[%s2 + $0x118] sm:$0xff]
  %v176 = vld [vmem:[%s2 + $0x120] sm:$0xff]
  %v177 = vld [vmem:[%s2 + $0x128] sm:$0xff]
  %v178 = vld [vmem:[%s2 + $0x130] sm:$0xff]
  %v179 = vld [vmem:[%s2 + $0x138] sm:$0xff]
  %v180 = vld [vmem:[%s2 + $0x140] sm:$0xff]
  %v181 = vld [vmem:[%s2 + $0x148] sm:$0xff]
  %v182 = vld [vmem:[%s2 + $0x150] sm:$0xff]
  %v183 = vld [vmem:[%s2 + $0x158] sm:$0xff]
  %v184 = vld [vmem:[%s2 + $0x160] sm:$0xff]
  %v185 = vld [vmem:[%s2 + $0x168] sm:$0xff]
  %v186 = vld [vmem:[%s2 + $0x170] sm:$0xff]
  %v187 = vld [vmem:[%s2 + $0x178] sm:$0xff]
  %v188 = vld [vmem:[%s2 + $0x180] sm:$0xff]
  %v189 = vld [vmem:[%s2 + $0x188] sm:$0xff]
  %v190 = vld [vmem:[%s2 + $0x190] sm:$0xff]
  %v191 = vld [vmem:[%s2 + $0x198] sm:$0xff]
  %v192 = vld [vmem:[%s2 + $0x1a0] sm:$0xff]
  %v193 = vld [vmem:[%s2 + $0x1a8] sm:$0xff]
  %v194 = vld [vmem:[%s2 + $0x1b0] sm:$0xff]
  %v195 = vld [vmem:[%s2 + $0x1b8] sm:$0xff]
  %v196 = vld [vmem:[%s2 + $0x1c0] sm:$0xff]
  %v197 = vld [vmem:[%s2 + $0x1c8] sm:$0xff]
  %v198 = vld [vmem:[%s2 + $0x1d0] sm:$0xff]
  %v199 = vld [vmem:[%s2 + $0x1d8] sm:$0xff]
  %v200 = vld [vmem:[%s2 + $0x1e0] sm:$0xff]
  %v201 = vld [vmem:[%s2 + $0x1e8] sm:$0xff]
  %v202 = vld [vmem:[%s2 + $0x1f0] sm:$0xff]
  %v203 = vld [vmem:[%s2 + $0x1f8] sm:$0xff]
  %v204 = vld [vmem:[%s2 + $0x200] sm:$0xff]
  %v205 = vld [vmem:[%s2 + $0x208] sm:$0xff]
  %v206 = vld [vmem:[%s2 + $0x210] sm:$0xff]
  %v207 = vld [vmem:[%s2 + $0x218] sm:$0xff]
  %v208 = vld [vmem:[%s2 + $0x220] sm:$0xff]
  %v209 = vld [vmem:[%s2 + $0x228] sm:$0xff]
  %v210 = vld [vmem:[%s2 + $0x230] sm:$0xff]
  %v211 = vld [vmem:[%s2 + $0x238] sm:$0xff]
  %v212 = vld [vmem:[%s2 + $0x240] sm:$0xff]
  %v213 = vld [vmem:[%s2 + $0x248] sm:$0xff]
  %v214 = vld [vmem:[%s2 + $0x250] sm:$0xff]
  %v215 = vld [vmem:[%s2 + $0x258] sm:$0xff]
  %v216 = vld [vmem:[%s2 + $0x260] sm:$0xff]
  %v217 = vld [vmem:[%s2 + $0x268] sm:$0xff]
  %v218 = vld [vmem:[%s2 + $0x270] sm:$0xff]
  %v219 = vld [vmem:[%s2 + $0x278] sm:$0xff]
  %v220 = vld [vmem:[%s2 + $0x280] sm:$0xff]
  %v221 = vld [vmem:[%s2 + $0x288] sm:$0xff]
  %v222 = vld [vmem:[%s2 + $0x290] sm:$0xff]
  %v223 = vld [vmem:[%s2 + $0x298] sm:$0xff]
  %v224 = vld [vmem:[%s2 + $0x2a0] sm:$0xff]
  %v225 = vld [vmem:[%s2 + $0x2a8] sm:$0xff]
  %v226 = vld [vmem:[%s2 + $0x2b0] sm:$0xff]
  %v227 = vld [vmem:[%s2 + $0x2b8] sm:$0xff]
  %v228 = vld [vmem:[%s2 + $0x2c0] sm:$0xff]
  %v229 = vld [vmem:[%s2 + $0x2c8] sm:$0xff]
  %v230 = vld [vmem:[%s2 + $0x2d0] sm:$0xff]
  %v231 = vld [vmem:[%s2 + $0x2d8] sm:$0xff]
  %v232 = vld [vmem:[%s2 + $0x2e0] sm:$0xff]
  %v233 = vld [vmem:[%s2 + $0x2e8] sm:$0xff]
  %v234 = vld [vmem:[%s2 + $0x2f0] sm:$0xff]
  %v235 = vld [vmem:[%s2 + $0x2f8] sm:$0xff]
  %v236 = vld [vmem:[%s2 + $0x300] sm:$0xff]
  %v237 = vld [vmem:[%s2 + $0x308] sm:$0xff]
  %v238 = vld [vmem:[%s2 + $0x310] sm:$0xff]
  %v239 = vld [vmem:[%s2 + $0x318] sm:$0xff]
  %v240 = vld [vmem:[%s2 + $0x320] sm:$0xff]
  %v241 = vld [vmem:[%s2 + $0x328] sm:$0xff]
  %v242 = vld [vmem:[%s2 + $0x330] sm:$0xff]
  %v243 = vld [vmem:[%s2 + $0x338] sm:$0xff]
  %v244 = vld [vmem:[%s2 + $0x340] sm:$0xff]
  %v245 = vld [vmem:[%s2 + $0x348] sm:$0xff]
  %v246 = vld [vmem:[%s2 + $0x350] sm:$0xff]
  %v247 = vld [vmem:[%s2 + $0x358] sm:$0xff]
  %v248 = vld [vmem:[%s2 + $0x360] sm:$0xff]
  %v249 = vld [vmem:[%s2 + $0x368] sm:$0xff]
  %v250 = vld [vmem:[%s2 + $0x370] sm:$0xff]
  %v251 = vld [vmem:[%s2 + $0x378] sm:$0xff]
  %v252 = vld [vmem:[%s2 + $0x380] sm:$0xff]
  %v253 = vld [vmem:[%s2 + $0x388] sm:$0xff]
  %v254 = vld [vmem:[%s2 + $0x390] sm:$0xff]
  %v255 = vld [vmem:[%s2 + $0x398] sm:$0xff]
  %v256 = vld [vmem:[%s2 + $0x3a0] sm:$0xff]
  %v257 = vld [vmem:[%s2 + $0x3a8] sm:$0xff]
  %v258 = vld [vmem:[%s2 + $0x3b0] sm:$0xff]
  %v259 = vld [vmem:[%s2 + $0x3b8] sm:$0xff]
  %v260 = vld [vmem:[%s2 + $0x3c0] sm:$0xff]
  %v261 = vld [vmem:[%s2 + $0x3c8] sm:$0xff]
  %v262 = vld [vmem:[%s2 + $0x3d0] sm:$0xff]
  %v263 = vld [vmem:[%s2 + $0x3d8] sm:$0xff]
  %v264 = vld [vmem:[%s2 + $0x3e0] sm:$0xff]
  %v265 = vld [vmem:[%s2 + $0x3e8] sm:$0xff]
  %v266 = vld [vmem:[%s2 + $0x3f0] sm:$0xff]
  %v267 = vld [vmem:[%s2 + $0x3f8] sm:$0xff]
  %v268 = vld [vmem:[%s2 + $0x400] sm:$0xff]
  %v269 = vld [vmem:[%s2 + $0x408] sm:$0xff]
  %v270 = vld [vmem:[%s2 + $0x410] sm:$0xff]
  %v271 = vld [vmem:[%s2 + $0x418] sm:$0xff]
  %v272 = vld [vmem:[%s2 + $0x420] sm:$0xff]
  %v273 = vld [vmem:[%s2 + $0x428] sm:$0xff]
  %v274 = vld [vmem:[%s2 + $0x430] sm:$0xff]
  %v275 = vld [vmem:[%s2 + $0x438] sm:$0xff]
  %v276 = vld [vmem:[%s2 + $0x440] sm:$0xff]
  %v277 = vld [vmem:[%s2 + $0x448] sm:$0xff]
  %v278 = vld [vmem:[%s2 + $0x450] sm:$0xff]
  %v279 = vld [vmem:[%s2 + $0x458] sm:$0xff]
  %v280 = vld [vmem:[%s2 + $0x460] sm:$0xff]
  %v281 = vld [vmem:[%s2 + $0x468] sm:$0xff]
  %v282 = vld [vmem:[%s2 + $0x470] sm:$0xff]
  %v283 = vld [vmem:[%s2 + $0x478] sm:$0xff]
  %v284 = vld [vmem:[%s2 + $0x480] sm:$0xff]
  %v285 = vld [vmem:[%s2 + $0x488] sm:$0xff]
  %v286 = vld [vmem:[%s2 + $0x490] sm:$0xff]
  %v287 = vld [vmem:[%s2 + $0x498] sm:$0xff]
  %v288 = vld [vmem:[%s2 + $0x4a0] sm:$0xff]
  %v289 = vld [vmem:[%s2 + $0x4a8] sm:$0xff]
  %v290 = vld [vmem:[%s2 + $0x4b0] sm:$0xff]
  %v291 = vld [vmem:[%s2 + $0x4b8] sm:$0xff]
  %v292 = vld [vmem:[%s2 + $0x4c0] sm:$0xff]
  %v293 = vld [vmem:[%s2 + $0x4c8] sm:$0xff]
  %v294 = vld [vmem:[%s2 + $0x4d0] sm:$0xff]
  %v295 = vld [vmem:[%s2 + $0x4d8] sm:$0xff]
  %v296 = vld [vmem:[%s2 + $0x4e0] sm:$0xff]
  %v297 = vld [vmem:[%s2 + $0x4e8] sm:$0xff]
  %v298 = vld [vmem:[%s2 + $0x4f0] sm:$0xff]
  %v299 = vld [vmem:[%s2 + $0x4f8] sm:$0xff]
  %v300 = vld [vmem:[%s2 + $0x500] sm:$0xff]
  %v301 = vld [vmem:[%s2 + $0x508] sm:$0xff]
  %v302 = vld [vmem:[%s2 + $0x510] sm:$0xff]
  %v303 = vld [vmem:[%s2 + $0x518] sm:$0xff]
  %v304 = vld [vmem:[%s2 + $0x520] sm:$0xff]
  %v305 = vld [vmem:[%s2 + $0x528] sm:$0xff]
  %v306 = vld [vmem:[%s2 + $0x530] sm:$0xff]
  %v307 = vld [vmem:[%s2 + $0x538] sm:$0xff]
  %v308 = vld [vmem:[%s2 + $0x540] sm:$0xff]
  %v309 = vld [vmem:[%s2 + $0x548] sm:$0xff]
  %v310 = vld [vmem:[%s2 + $0x550] sm:$0xff]
  %v311 = vld [vmem:[%s2 + $0x558] sm:$0xff]
  %v312 = vld [vmem:[%s2 + $0x560] sm:$0xff]
  %v313 = vld [vmem:[%s2 + $0x568] sm:$0xff]
  %v314 = vld [vmem:[%s2 + $0x570] sm:$0xff]
  %v315 = vld [vmem:[%s2 + $0x578] sm:$0xff]
  %v316 = vld [vmem:[%s2 + $0x580] sm:$0xff]
  %v317 = vld [vmem:[%s2 + $0x588] sm:$0xff]
  %v318 = vld [vmem:[%s2 + $0x590] sm:$0xff]
  %v319 = vld [vmem:[%s2 + $0x598] sm:$0xff]
  %v320 = vld [vmem:[%s2 + $0x5a0] sm:$0xff]
  %v321 = vld [vmem:[%s2 + $0x5a8] sm:$0xff]
  %v322 = vld [vmem:[%s2 + $0x5b0] sm:$0xff]
  %v323 = vld [vmem:[%s2 + $0x5b8] sm:$0xff]
  %v324 = vld [vmem:[%s2 + $0x5c0] sm:$0xff]
  %v325 = vld [vmem:[%s2 + $0x5c8] sm:$0xff]
  %v326 = vld [vmem:[%s2 + $0x5d0] sm:$0xff]
  %v327 = vld [vmem:[%s2 + $0x5d8] sm:$0xff]
  %v328 = vld [vmem:[%s2 + $0x5e0] sm:$0xff]
  %v329 = vld [vmem:[%s2 + $0x5e8] sm:$0xff]
  %v330 = vld [vmem:[%s2 + $0x5f0] sm:$0xff]
  %v331 = vld [vmem:[%s2 + $0x5f8] sm:$0xff]
  %v332 = vld [vmem:[%s2 + $0x600] sm:$0xff]
  %v333 = vld [vmem:[%s2 + $0x608] sm:$0xff]
  %v334 = vld [vmem:[%s2 + $0x610] sm:$0xff]
  %v335 = vld [vmem:[%s2 + $0x618] sm:$0xff]
  %v336 = vld [vmem:[%s2 + $0x620] sm:$0xff]
  %v337 = vld [vmem:[%s2 + $0x628] sm:$0xff]
  %v338 = vld [vmem:[%s2 + $0x630] sm:$0xff]
  %v339 = vld [vmem:[%s2 + $0x638] sm:$0xff]
  %v340 = vld [vmem:[%s2 + $0x640] sm:$0xff]
  %v341 = vld [vmem:[%s2 + $0x648] sm:$0xff]
  %v342 = vld [vmem:[%s2 + $0x650] sm:$0xff]
  %v343 = vld [vmem:[%s2 + $0x658] sm:$0xff]
  %v344 = vld [vmem:[%s2 + $0x660] sm:$0xff]
  %v345 = vld [vmem:[%s2 + $0x668] sm:$0xff]
  %v346 = vld [vmem:[%s2 + $0x670] sm:$0xff]
  %v347 = vld [vmem:[%s2 + $0x678] sm:$0xff]
  %v348 = vld [vmem:[%s2 + $0x680] sm:$0xff]
  %v349 = vld [vmem:[%s2 + $0x688] sm:$0xff]
  %v350 = vld [vmem:[%s2 + $0x690] sm:$0xff]
  %v351 = vld [vmem:[%s2 + $0x698] sm:$0xff]
  %v352 = vld [vmem:[%s2 + $0x6a0] sm:$0xff]
  %v353 = vld [vmem:[%s2 + $0x6a8] sm:$0xff]
  %v354 = vld [vmem:[%s2 + $0x6b0] sm:$0xff]
  %v355 = vld [vmem:[%s2 + $0x6b8] sm:$0xff]
  %v356 = vld [vmem:[%s2 + $0x6c0] sm:$0xff]
  %v357 = vld [vmem:[%s2 + $0x6c8] sm:$0xff]
  %v358 = vld [vmem:[%s2 + $0x6d0] sm:$0xff]
  %v359 = vld [vmem:[%s2 + $0x6d8] sm:$0xff]
  %v360 = vld [vmem:[%s2 + $0x6e0] sm:$0xff]
  %v361 = vld [vmem:[%s2 + $0x6e8] sm:$0xff]
  %v362 = vld [vmem:[%s2 + $0x6f0] sm:$0xff]
  %v363 = vld [vmem:[%s2 + $0x6f8] sm:$0xff]
  %v364 = vld [vmem:[%s2 + $0x700] sm:$0xff]
  %v365 = vld [vmem:[%s2 + $0x708] sm:$0xff]
  %v366 = vld [vmem:[%s3] sm:$0x3]
  %v368 = vlaneseq
  %v369 = vshrl.u32 %v368, 7
  %v370 = vsub.s32 0, %v369
  %v371 = vrot.slane %v366, %v370
  %v372 = vlaneseq
  %v373 = vshrl.u32 %v372, 7
  %v374 = vsub.s32 1, %v373
  %v375 = vrot.slane %v366, %v374
  %v604 = vunpack.c.l.b16 %v140
  %v605 = vunpack.c.h.b16 %v140
  %v606 = vunpack.c.l.b16 %v141
  %v607 = vunpack.c.h.b16 %v141
  %v608 = vunpack.c.l.b16 %v142
  %v609 = vunpack.c.h.b16 %v142
  %v610 = vunpack.c.l.b16 %v143
  %v611 = vunpack.c.h.b16 %v143
  %v612 = vunpack.c.l.b16 %v144
  %v613 = vunpack.c.h.b16 %v144
  %v614 = vunpack.c.l.b16 %v145
  %v615 = vunpack.c.h.b16 %v145
  %v616 = vunpack.c.l.b16 %v146
  %v617 = vunpack.c.h.b16 %v146
  %v618 = vunpack.c.l.b16 %v147
  %v619 = vunpack.c.h.b16 %v147
  %v620 = vunpack.c.l.b16 %v148
  %v621 = vunpack.c.h.b16 %v148
  %v622 = vunpack.c.l.b16 %v149
  %v623 = vunpack.c.h.b16 %v149
  %v624 = vunpack.c.l.b16 %v150
  %v625 = vunpack.c.h.b16 %v150
  %v626 = vunpack.c.l.b16 %v151
  %v627 = vunpack.c.h.b16 %v151
  %v628 = vunpack.c.l.b16 %v152
  %v629 = vunpack.c.h.b16 %v152
  %v630 = vunpack.c.l.b16 %v153
  %v631 = vunpack.c.h.b16 %v153
  %v632 = vunpack.c.l.b16 %v154
  %v633 = vunpack.c.h.b16 %v154
  %v634 = vunpack.c.l.b16 %v155
  %v635 = vunpack.c.h.b16 %v155
  %v636 = vunpack.c.l.b16 %v156
  %v637 = vunpack.c.h.b16 %v156
  %v638 = vunpack.c.l.b16 %v157
  %v639 = vunpack.c.h.b16 %v157
  %v640 = vunpack.c.l.b16 %v158
  %v641 = vunpack.c.h.b16 %v158
  %v642 = vunpack.c.l.b16 %v159
  %v643 = vunpack.c.h.b16 %v159
  %v644 = vunpack.c.l.b16 %v160
  %v645 = vunpack.c.h.b16 %v160
  %v646 = vunpack.c.l.b16 %v161
  %v647 = vunpack.c.h.b16 %v161
  %v648 = vunpack.c.l.b16 %v162
  %v649 = vunpack.c.h.b16 %v162
  %v650 = vunpack.c.l.b16 %v163
  %v651 = vunpack.c.h.b16 %v163
  %v652 = vunpack.c.l.b16 %v164
  %v653 = vunpack.c.h.b16 %v164
  %v654 = vunpack.c.l.b16 %v165
  %v655 = vunpack.c.h.b16 %v165
  %v656 = vunpack.c.l.b16 %v166
  %v657 = vunpack.c.h.b16 %v166
  %v658 = vunpack.c.l.b16 %v167
  %v659 = vunpack.c.h.b16 %v167
  %v660 = vunpack.c.l.b16 %v168
  %v661 = vunpack.c.h.b16 %v168
  %v662 = vunpack.c.l.b16 %v169
  %v663 = vunpack.c.h.b16 %v169
  %v664 = vunpack.c.l.b16 %v170
  %v665 = vunpack.c.h.b16 %v170
  %v666 = vunpack.c.l.b16 %v171
  %v667 = vunpack.c.h.b16 %v171
  %v668 = vunpack.c.l.b16 %v172
  %v669 = vunpack.c.h.b16 %v172
  %v670 = vunpack.c.l.b16 %v173
  %v671 = vunpack.c.h.b16 %v173
  %v672 = vunpack.c.l.b16 %v174
  %v673 = vunpack.c.h.b16 %v174
  %v674 = vunpack.c.l.b16 %v175
  %v675 = vunpack.c.h.b16 %v175
  %v676 = vunpack.c.l.b16 %v176
  %v677 = vunpack.c.h.b16 %v176
  %v678 = vunpack.c.l.b16 %v177
  %v679 = vunpack.c.h.b16 %v177
  %v680 = vunpack.c.l.b16 %v178
  %v681 = vunpack.c.h.b16 %v178
  %v682 = vunpack.c.l.b16 %v179
  %v683 = vunpack.c.h.b16 %v179
  %v684 = vunpack.c.l.b16 %v180
  %v685 = vunpack.c.h.b16 %v180
  %v686 = vunpack.c.l.b16 %v181
  %v687 = vunpack.c.h.b16 %v181
  %v688 = vunpack.c.l.b16 %v182
  %v689 = vunpack.c.h.b16 %v182
  %v690 = vunpack.c.l.b16 %v183
  %v691 = vunpack.c.h.b16 %v183
  %v692 = vunpack.c.l.b16 %v184
  %v693 = vunpack.c.h.b16 %v184
  %v694 = vunpack.c.l.b16 %v185
  %v695 = vunpack.c.h.b16 %v185
  %v696 = vunpack.c.l.b16 %v186
  %v697 = vunpack.c.h.b16 %v186
  %v698 = vunpack.c.l.b16 %v187
  %v699 = vunpack.c.h.b16 %v187
  %v700 = vunpack.c.l.b16 %v188
  %v701 = vunpack.c.h.b16 %v188
  %v702 = vunpack.c.l.b16 %v189
  %v703 = vunpack.c.h.b16 %v189
  %v704 = vunpack.c.l.b16 %v190
  %v705 = vunpack.c.h.b16 %v190
  %v706 = vunpack.c.l.b16 %v191
  %v707 = vunpack.c.h.b16 %v191
  %v708 = vunpack.c.l.b16 %v192
  %v709 = vunpack.c.h.b16 %v192
  %v710 = vunpack.c.l.b16 %v193
  %v711 = vunpack.c.h.b16 %v193
  %v712 = vunpack.c.l.b16 %v194
  %v713 = vunpack.c.h.b16 %v194
  %v714 = vunpack.c.l.b16 %v195
  %v715 = vunpack.c.h.b16 %v195
  %v716 = vunpack.c.l.b16 %v196
  %v717 = vunpack.c.h.b16 %v196
  %v718 = vunpack.c.l.b16 %v197
  %v719 = vunpack.c.h.b16 %v197
  %v720 = vunpack.c.l.b16 %v198
  %v721 = vunpack.c.h.b16 %v198
  %v722 = vunpack.c.l.b16 %v199
  %v723 = vunpack.c.h.b16 %v199
  %v724 = vunpack.c.l.b16 %v200
  %v725 = vunpack.c.h.b16 %v200
  %v726 = vunpack.c.l.b16 %v201
  %v727 = vunpack.c.h.b16 %v201
  %v728 = vunpack.c.l.b16 %v202
  %v729 = vunpack.c.h.b16 %v202
  %v730 = vunpack.c.l.b16 %v203
  %v731 = vunpack.c.h.b16 %v203
  %v732 = vunpack.c.l.b16 %v204
  %v733 = vunpack.c.h.b16 %v204
  %v734 = vunpack.c.l.b16 %v205
  %v735 = vunpack.c.h.b16 %v205
  %v736 = vunpack.c.l.b16 %v206
  %v737 = vunpack.c.h.b16 %v206
  %v738 = vunpack.c.l.b16 %v207
  %v739 = vunpack.c.h.b16 %v207
  %v740 = vunpack.c.l.b16 %v208
  %v741 = vunpack.c.h.b16 %v208
  %v742 = vunpack.c.l.b16 %v209
  %v743 = vunpack.c.h.b16 %v209
  %v744 = vunpack.c.l.b16 %v210
  %v745 = vunpack.c.h.b16 %v210
  %v746 = vunpack.c.l.b16 %v211
  %v747 = vunpack.c.h.b16 %v211
  %v748 = vunpack.c.l.b16 %v212
  %v749 = vunpack.c.h.b16 %v212
  %v750 = vunpack.c.l.b16 %v213
  %v751 = vunpack.c.h.b16 %v213
  %v752 = vunpack.c.l.b16 %v214
  %v753 = vunpack.c.h.b16 %v214
  %v754 = vunpack.c.l.b16 %v215
  %v755 = vunpack.c.h.b16 %v215
  %v756 = vunpack.c.l.b16 %v216
  %v757 = vunpack.c.h.b16 %v216
  %v758 = vunpack.c.l.b16 %v217
  %v759 = vunpack.c.h.b16 %v217
  %v760 = vunpack.c.l.b16 %v218
  %v761 = vunpack.c.h.b16 %v218
  %v762 = vunpack.c.l.b16 %v219
  %v763 = vunpack.c.h.b16 %v219
  %v764 = vunpack.c.l.b16 %v220
  %v765 = vunpack.c.h.b16 %v220
  %v766 = vunpack.c.l.b16 %v221
  %v767 = vunpack.c.h.b16 %v221
  %v768 = vunpack.c.l.b16 %v222
  %v769 = vunpack.c.h.b16 %v222
  %v770 = vunpack.c.l.b16 %v223
  %v771 = vunpack.c.h.b16 %v223
  %v772 = vunpack.c.l.b16 %v224
  %v773 = vunpack.c.h.b16 %v224
  %v774 = vunpack.c.l.b16 %v225
  %v775 = vunpack.c.h.b16 %v225
  %v776 = vunpack.c.l.b16 %v226
  %v777 = vunpack.c.h.b16 %v226
  %v778 = vunpack.c.l.b16 %v227
  %v779 = vunpack.c.h.b16 %v227
  %v780 = vunpack.c.l.b16 %v228
  %v781 = vunpack.c.h.b16 %v228
  %v782 = vunpack.c.l.b16 %v229
  %v783 = vunpack.c.h.b16 %v229
  %v784 = vunpack.c.l.b16 %v230
  %v785 = vunpack.c.h.b16 %v230
  %v786 = vunpack.c.l.b16 %v231
  %v787 = vunpack.c.h.b16 %v231
  %v788 = vunpack.c.l.b16 %v232
  %v789 = vunpack.c.h.b16 %v232
  %v790 = vunpack.c.l.b16 %v233
  %v791 = vunpack.c.h.b16 %v233
  %v792 = vunpack.c.l.b16 %v234
  %v793 = vunpack.c.h.b16 %v234
  %v794 = vunpack.c.l.b16 %v235
  %v795 = vunpack.c.h.b16 %v235
  %v796 = vunpack.c.l.b16 %v236
  %v797 = vunpack.c.h.b16 %v236
  %v798 = vunpack.c.l.b16 %v237
  %v799 = vunpack.c.h.b16 %v237
  %v800 = vunpack.c.l.b16 %v238
  %v801 = vunpack.c.h.b16 %v238
  %v802 = vunpack.c.l.b16 %v239
  %v803 = vunpack.c.h.b16 %v239
  %v804 = vunpack.c.l.b16 %v240
  %v805 = vunpack.c.h.b16 %v240
  %v806 = vunpack.c.l.b16 %v241
  %v807 = vunpack.c.h.b16 %v241
  %v808 = vunpack.c.l.b16 %v242
  %v809 = vunpack.c.h.b16 %v242
  %v810 = vunpack.c.l.b16 %v243
  %v811 = vunpack.c.h.b16 %v243
  %v812 = vunpack.c.l.b16 %v244
  %v813 = vunpack.c.h.b16 %v244
  %v814 = vunpack.c.l.b16 %v245
  %v815 = vunpack.c.h.b16 %v245
  %v816 = vunpack.c.l.b16 %v246
  %v817 = vunpack.c.h.b16 %v246
  %v818 = vunpack.c.l.b16 %v247
  %v819 = vunpack.c.h.b16 %v247
  %v820 = vunpack.c.l.b16 %v248
  %v821 = vunpack.c.h.b16 %v248
  %v822 = vunpack.c.l.b16 %v249
  %v823 = vunpack.c.h.b16 %v249
  %v824 = vunpack.c.l.b16 %v250
  %v825 = vunpack.c.h.b16 %v250
  %v826 = vunpack.c.l.b16 %v251
  %v827 = vunpack.c.h.b16 %v251
  %v828 = vunpack.c.l.b16 %v252
  %v829 = vunpack.c.h.b16 %v252
  %v830 = vunpack.c.l.b16 %v253
  %v831 = vunpack.c.h.b16 %v253
  %v832 = vunpack.c.l.b16 %v254
  %v833 = vunpack.c.h.b16 %v254
  %v834 = vunpack.c.l.b16 %v255
  %v835 = vunpack.c.h.b16 %v255
  %v836 = vunpack.c.l.b16 %v256
  %v837 = vunpack.c.h.b16 %v256
  %v838 = vunpack.c.l.b16 %v257
  %v839 = vunpack.c.h.b16 %v257
  %v840 = vunpack.c.l.b16 %v258
  %v841 = vunpack.c.h.b16 %v258
  %v842 = vunpack.c.l.b16 %v259
  %v843 = vunpack.c.h.b16 %v259
  %v844 = vunpack.c.l.b16 %v260
  %v845 = vunpack.c.h.b16 %v260
  %v846 = vunpack.c.l.b16 %v261
  %v847 = vunpack.c.h.b16 %v261
  %v848 = vunpack.c.l.b16 %v262
  %v849 = vunpack.c.h.b16 %v262
  %v850 = vunpack.c.l.b16 %v263
  %v851 = vunpack.c.h.b16 %v263
  %v852 = vunpack.c.l.b16 %v264
  %v853 = vunpack.c.h.b16 %v264
  %v854 = vunpack.c.l.b16 %v265
  %v855 = vunpack.c.h.b16 %v265
  %v856 = vunpack.c.l.b16 %v266
  %v857 = vunpack.c.h.b16 %v266
  %v858 = vunpack.c.l.b16 %v267
  %v859 = vunpack.c.h.b16 %v267
  %v860 = vunpack.c.l.b16 %v268
  %v861 = vunpack.c.h.b16 %v268
  %v862 = vunpack.c.l.b16 %v269
  %v863 = vunpack.c.h.b16 %v269
  %v864 = vunpack.c.l.b16 %v270
  %v865 = vunpack.c.h.b16 %v270
  %v866 = vunpack.c.l.b16 %v271
  %v867 = vunpack.c.h.b16 %v271
  %v868 = vunpack.c.l.b16 %v272
  %v869 = vunpack.c.h.b16 %v272
  %v870 = vunpack.c.l.b16 %v273
  %v871 = vunpack.c.h.b16 %v273
  %v872 = vunpack.c.l.b16 %v274
  %v873 = vunpack.c.h.b16 %v274
  %v874 = vunpack.c.l.b16 %v275
  %v875 = vunpack.c.h.b16 %v275
  %v876 = vunpack.c.l.b16 %v276
  %v877 = vunpack.c.h.b16 %v276
  %v878 = vunpack.c.l.b16 %v277
  %v879 = vunpack.c.h.b16 %v277
  %v880 = vunpack.c.l.b16 %v278
  %v881 = vunpack.c.h.b16 %v278
  %v882 = vunpack.c.l.b16 %v279
  %v883 = vunpack.c.h.b16 %v279
  %v884 = vunpack.c.l.b16 %v280
  %v885 = vunpack.c.h.b16 %v280
  %v886 = vunpack.c.l.b16 %v281
  %v887 = vunpack.c.h.b16 %v281
  %v888 = vunpack.c.l.b16 %v282
  %v889 = vunpack.c.h.b16 %v282
  %v890 = vunpack.c.l.b16 %v283
  %v891 = vunpack.c.h.b16 %v283
  %v892 = vunpack.c.l.b16 %v284
  %v893 = vunpack.c.h.b16 %v284
  %v894 = vunpack.c.l.b16 %v285
  %v895 = vunpack.c.h.b16 %v285
  %v896 = vunpack.c.l.b16 %v286
  %v897 = vunpack.c.h.b16 %v286
  %v898 = vunpack.c.l.b16 %v287
  %v899 = vunpack.c.h.b16 %v287
  %v900 = vunpack.c.l.b16 %v288
  %v901 = vunpack.c.h.b16 %v288
  %v902 = vunpack.c.l.b16 %v289
  %v903 = vunpack.c.h.b16 %v289
  %v904 = vunpack.c.l.b16 %v290
  %v905 = vunpack.c.h.b16 %v290
  %v906 = vunpack.c.l.b16 %v291
  %v907 = vunpack.c.h.b16 %v291
  %v908 = vunpack.c.l.b16 %v292
  %v909 = vunpack.c.h.b16 %v292
  %v910 = vunpack.c.l.b16 %v293
  %v911 = vunpack.c.h.b16 %v293
  %v912 = vunpack.c.l.b16 %v294
  %v913 = vunpack.c.h.b16 %v294
  %v914 = vunpack.c.l.b16 %v295
  %v915 = vunpack.c.h.b16 %v295
  %v916 = vunpack.c.l.b16 %v296
  %v917 = vunpack.c.h.b16 %v296
  %v918 = vunpack.c.l.b16 %v297
  %v919 = vunpack.c.h.b16 %v297
  %v920 = vunpack.c.l.b16 %v298
  %v921 = vunpack.c.h.b16 %v298
  %v922 = vunpack.c.l.b16 %v299
  %v923 = vunpack.c.h.b16 %v299
  %v924 = vunpack.c.l.b16 %v300
  %v925 = vunpack.c.h.b16 %v300
  %v926 = vunpack.c.l.b16 %v301
  %v927 = vunpack.c.h.b16 %v301
  %v928 = vunpack.c.l.b16 %v302
  %v929 = vunpack.c.h.b16 %v302
  %v930 = vunpack.c.l.b16 %v303
  %v931 = vunpack.c.h.b16 %v303
  %v932 = vunpack.c.l.b16 %v304
  %v933 = vunpack.c.h.b16 %v304
  %v934 = vunpack.c.l.b16 %v305
  %v935 = vunpack.c.h.b16 %v305
  %v936 = vunpack.c.l.b16 %v306
  %v937 = vunpack.c.h.b16 %v306
  %v938 = vunpack.c.l.b16 %v307
  %v939 = vunpack.c.h.b16 %v307
  %v940 = vunpack.c.l.b16 %v308
  %v941 = vunpack.c.h.b16 %v308
  %v942 = vunpack.c.l.b16 %v309
  %v943 = vunpack.c.h.b16 %v309
  %v944 = vunpack.c.l.b16 %v310
  %v945 = vunpack.c.h.b16 %v310
  %v946 = vunpack.c.l.b16 %v311
  %v947 = vunpack.c.h.b16 %v311
  %v948 = vunpack.c.l.b16 %v312
  %v949 = vunpack.c.h.b16 %v312
  %v950 = vunpack.c.l.b16 %v313
  %v951 = vunpack.c.h.b16 %v313
  %v952 = vunpack.c.l.b16 %v314
  %v953 = vunpack.c.h.b16 %v314
  %v954 = vunpack.c.l.b16 %v315
  %v955 = vunpack.c.h.b16 %v315
  %v956 = vunpack.c.l.b16 %v316
  %v957 = vunpack.c.h.b16 %v316
  %v958 = vunpack.c.l.b16 %v317
  %v959 = vunpack.c.h.b16 %v317
  %v960 = vunpack.c.l.b16 %v318
  %v961 = vunpack.c.h.b16 %v318
  %v962 = vunpack.c.l.b16 %v319
  %v963 = vunpack.c.h.b16 %v319
  %v964 = vunpack.c.l.b16 %v320
  %v965 = vunpack.c.h.b16 %v320
  %v966 = vunpack.c.l.b16 %v321
  %v967 = vunpack.c.h.b16 %v321
  %v968 = vunpack.c.l.b16 %v322
  %v969 = vunpack.c.h.b16 %v322
  %v970 = vunpack.c.l.b16 %v323
  %v971 = vunpack.c.h.b16 %v323
  %v972 = vunpack.c.l.b16 %v324
  %v973 = vunpack.c.h.b16 %v324
  %v974 = vunpack.c.l.b16 %v325
  %v975 = vunpack.c.h.b16 %v325
  %v976 = vunpack.c.l.b16 %v326
  %v977 = vunpack.c.h.b16 %v326
  %v978 = vunpack.c.l.b16 %v327
  %v979 = vunpack.c.h.b16 %v327
  %v980 = vunpack.c.l.b16 %v328
  %v981 = vunpack.c.h.b16 %v328
  %v982 = vunpack.c.l.b16 %v329
  %v983 = vunpack.c.h.b16 %v329
  %v984 = vunpack.c.l.b16 %v330
  %v985 = vunpack.c.h.b16 %v330
  %v986 = vunpack.c.l.b16 %v331
  %v987 = vunpack.c.h.b16 %v331
  %v988 = vunpack.c.l.b16 %v332
  %v989 = vunpack.c.h.b16 %v332
  %v990 = vunpack.c.l.b16 %v333
  %v991 = vunpack.c.h.b16 %v333
  %v992 = vunpack.c.l.b16 %v334
  %v993 = vunpack.c.h.b16 %v334
  %v994 = vunpack.c.l.b16 %v335
  %v995 = vunpack.c.h.b16 %v335
  %v996 = vunpack.c.l.b16 %v336
  %v997 = vunpack.c.h.b16 %v336
  %v998 = vunpack.c.l.b16 %v337
  %v999 = vunpack.c.h.b16 %v337
  %v1000 = vunpack.c.l.b16 %v338
  %v1001 = vunpack.c.h.b16 %v338
  %v1002 = vunpack.c.l.b16 %v339
  %v1003 = vunpack.c.h.b16 %v339
  %v1004 = vunpack.c.l.b16 %v340
  %v1005 = vunpack.c.h.b16 %v340
  %v1006 = vunpack.c.l.b16 %v341
  %v1007 = vunpack.c.h.b16 %v341
  %v1008 = vunpack.c.l.b16 %v342
  %v1009 = vunpack.c.h.b16 %v342
  %v1010 = vunpack.c.l.b16 %v343
  %v1011 = vunpack.c.h.b16 %v343
  %v1012 = vunpack.c.l.b16 %v344
  %v1013 = vunpack.c.h.b16 %v344
  %v1014 = vunpack.c.l.b16 %v345
  %v1015 = vunpack.c.h.b16 %v345
  %v1016 = vunpack.c.l.b16 %v346
  %v1017 = vunpack.c.h.b16 %v346
  %v1018 = vunpack.c.l.b16 %v347
  %v1019 = vunpack.c.h.b16 %v347
  %v1020 = vunpack.c.l.b16 %v348
  %v1021 = vunpack.c.h.b16 %v348
  %v1022 = vunpack.c.l.b16 %v349
  %v1023 = vunpack.c.h.b16 %v349
  %v1024 = vunpack.c.l.b16 %v350
  %v1025 = vunpack.c.h.b16 %v350
  %v1026 = vunpack.c.l.b16 %v351
  %v1027 = vunpack.c.h.b16 %v351
  %v1028 = vunpack.c.l.b16 %v352
  %v1029 = vunpack.c.h.b16 %v352
  %v1030 = vunpack.c.l.b16 %v353
  %v1031 = vunpack.c.h.b16 %v353
  %v1032 = vunpack.c.l.b16 %v354
  %v1033 = vunpack.c.h.b16 %v354
  %v1034 = vunpack.c.l.b16 %v355
  %v1035 = vunpack.c.h.b16 %v355
  %v1036 = vunpack.c.l.b16 %v356
  %v1037 = vunpack.c.h.b16 %v356
  %v1038 = vunpack.c.l.b16 %v357
  %v1039 = vunpack.c.h.b16 %v357
  %v1040 = vunpack.c.l.b16 %v358
  %v1041 = vunpack.c.h.b16 %v358
  %v1042 = vunpack.c.l.b16 %v359
  %v1043 = vunpack.c.h.b16 %v359
  %v1044 = vunpack.c.l.b16 %v360
  %v1045 = vunpack.c.h.b16 %v360
  %v1046 = vunpack.c.l.b16 %v361
  %v1047 = vunpack.c.h.b16 %v361
  %v1048 = vunpack.c.l.b16 %v362
  %v1049 = vunpack.c.h.b16 %v362
  %v1050 = vunpack.c.l.b16 %v363
  %v1051 = vunpack.c.h.b16 %v363
  %v1052 = vunpack.c.l.b16 %v364
  %v1053 = vunpack.c.h.b16 %v364
  %v1054 = vunpack.c.l.b16 %v365
  %v1055 = vunpack.c.h.b16 %v365
  %v1056 = vpack.c.b16 %v606, %v604
  %v1057 = vpack.c.b16 %v607, %v605
  %v1058 = vpack.c.b16 %v610, %v608
  %v1059 = vpack.c.b16 %v611, %v609
  %v1060 = vpack.c.b16 %v614, %v612
  %v1061 = vpack.c.b16 %v615, %v613
  %v1062 = vpack.c.b16 %v618, %v616
  %v1063 = vpack.c.b16 %v619, %v617
  %v1064 = vpack.c.b16 %v622, %v620
  %v1065 = vpack.c.b16 %v623, %v621
  %v1066 = vpack.c.b16 %v626, %v624
  %v1067 = vpack.c.b16 %v627, %v625
  %v1068 = vpack.c.b16 %v630, %v628
  %v1069 = vpack.c.b16 %v631, %v629
  %v1070 = vpack.c.b16 %v634, %v632
  %v1071 = vpack.c.b16 %v635, %v633
  %v1072 = vpack.c.b16 %v638, %v636
  %v1073 = vpack.c.b16 %v639, %v637
  %v1074 = vpack.c.b16 %v642, %v640
  %v1075 = vpack.c.b16 %v643, %v641
  %v1076 = vpack.c.b16 %v646, %v644
  %v1077 = vpack.c.b16 %v647, %v645
  %v1078 = vpack.c.b16 %v650, %v648
  %v1079 = vpack.c.b16 %v651, %v649
  %v1080 = vpack.c.b16 %v654, %v652
  %v1081 = vpack.c.b16 %v655, %v653
  %v1082 = vpack.c.b16 %v658, %v656
  %v1083 = vpack.c.b16 %v659, %v657
  %v1084 = vpack.c.b16 %v662, %v660
  %v1085 = vpack.c.b16 %v663, %v661
  %v1086 = vpack.c.b16 %v666, %v664
  %v1087 = vpack.c.b16 %v667, %v665
  %v1088 = vpack.c.b16 %v670, %v668
  %v1089 = vpack.c.b16 %v671, %v669
  %v1090 = vpack.c.b16 %v674, %v672
  %v1091 = vpack.c.b16 %v675, %v673
  %v1092 = vpack.c.b16 %v678, %v676
  %v1093 = vpack.c.b16 %v679, %v677
  %v1094 = vpack.c.b16 %v682, %v680
  %v1095 = vpack.c.b16 %v683, %v681
  %v1096 = vpack.c.b16 %v686, %v684
  %v1097 = vpack.c.b16 %v687, %v685
  %v1098 = vpack.c.b16 %v690, %v688
  %v1099 = vpack.c.b16 %v691, %v689
  %v1100 = vpack.c.b16 %v694, %v692
  %v1101 = vpack.c.b16 %v695, %v693
  %v1102 = vpack.c.b16 %v698, %v696
  %v1103 = vpack.c.b16 %v699, %v697
  %v1104 = vpack.c.b16 %v702, %v700
  %v1105 = vpack.c.b16 %v703, %v701
  %v1106 = vpack.c.b16 %v706, %v704
  %v1107 = vpack.c.b16 %v707, %v705
  %v1108 = vpack.c.b16 %v710, %v708
  %v1109 = vpack.c.b16 %v711, %v709
  %v1110 = vpack.c.b16 %v714, %v712
  %v1111 = vpack.c.b16 %v715, %v713
  %v1112 = vpack.c.b16 %v718, %v716
  %v1113 = vpack.c.b16 %v719, %v717
  %v1114 = vpack.c.b16 %v722, %v720
  %v1115 = vpack.c.b16 %v723, %v721
  %v1116 = vpack.c.b16 %v726, %v724
  %v1117 = vpack.c.b16 %v727, %v725
  %v1118 = vpack.c.b16 %v730, %v728
  %v1119 = vpack.c.b16 %v731, %v729
  %v1120 = vpack.c.b16 %v734, %v732
  %v1121 = vpack.c.b16 %v735, %v733
  %v1122 = vpack.c.b16 %v738, %v736
  %v1123 = vpack.c.b16 %v739, %v737
  %v1124 = vpack.c.b16 %v742, %v740
  %v1125 = vpack.c.b16 %v743, %v741
  %v1126 = vpack.c.b16 %v746, %v744
  %v1127 = vpack.c.b16 %v747, %v745
  %v1128 = vpack.c.b16 %v750, %v748
  %v1129 = vpack.c.b16 %v751, %v749
  %v1130 = vpack.c.b16 %v754, %v752
  %v1131 = vpack.c.b16 %v755, %v753
  %v1132 = vpack.c.b16 %v758, %v756
  %v1133 = vpack.c.b16 %v759, %v757
  %v1134 = vpack.c.b16 %v762, %v760
  %v1135 = vpack.c.b16 %v763, %v761
  %v1136 = vpack.c.b16 %v766, %v764
  %v1137 = vpack.c.b16 %v767, %v765
  %v1138 = vpack.c.b16 %v770, %v768
  %v1139 = vpack.c.b16 %v771, %v769
  %v1140 = vpack.c.b16 %v774, %v772
  %v1141 = vpack.c.b16 %v775, %v773
  %v1142 = vpack.c.b16 %v778, %v776
  %v1143 = vpack.c.b16 %v779, %v777
  %v1144 = vpack.c.b16 %v782, %v780
  %v1145 = vpack.c.b16 %v783, %v781
  %v1146 = vpack.c.b16 %v786, %v784
  %v1147 = vpack.c.b16 %v787, %v785
  %v1148 = vpack.c.b16 %v790, %v788
  %v1149 = vpack.c.b16 %v791, %v789
  %v1150 = vpack.c.b16 %v794, %v792
  %v1151 = vpack.c.b16 %v795, %v793
  %v1152 = vpack.c.b16 %v798, %v796
  %v1153 = vpack.c.b16 %v799, %v797
  %v1154 = vpack.c.b16 %v802, %v800
  %v1155 = vpack.c.b16 %v803, %v801
  %v1156 = vpack.c.b16 %v806, %v804
  %v1157 = vpack.c.b16 %v807, %v805
  %v1158 = vpack.c.b16 %v810, %v808
  %v1159 = vpack.c.b16 %v811, %v809
  %v1160 = vpack.c.b16 %v814, %v812
  %v1161 = vpack.c.b16 %v815, %v813
  %v1162 = vpack.c.b16 %v818, %v816
  %v1163 = vpack.c.b16 %v819, %v817
  %v1164 = vpack.c.b16 %v822, %v820
  %v1165 = vpack.c.b16 %v823, %v821
  %v1166 = vpack.c.b16 %v826, %v824
  %v1167 = vpack.c.b16 %v827, %v825
  %v1168 = vpack.c.b16 %v830, %v828
  %v1169 = vpack.c.b16 %v831, %v829
  %v1170 = vpack.c.b16 %v834, %v832
  %v1171 = vpack.c.b16 %v835, %v833
  %v1172 = vpack.c.b16 %v838, %v836
  %v1173 = vpack.c.b16 %v839, %v837
  %v1174 = vpack.c.b16 %v842, %v840
  %v1175 = vpack.c.b16 %v843, %v841
  %v1176 = vpack.c.b16 %v846, %v844
  %v1177 = vpack.c.b16 %v847, %v845
  %v1178 = vpack.c.b16 %v850, %v848
  %v1179 = vpack.c.b16 %v851, %v849
  %v1180 = vpack.c.b16 %v854, %v852
  %v1181 = vpack.c.b16 %v855, %v853
  %v1182 = vpack.c.b16 %v858, %v856
  %v1183 = vpack.c.b16 %v859, %v857
  %v1184 = vpack.c.b16 %v862, %v860
  %v1185 = vpack.c.b16 %v863, %v861
  %v1186 = vpack.c.b16 %v866, %v864
  %v1187 = vpack.c.b16 %v867, %v865
  %v1188 = vpack.c.b16 %v870, %v868
  %v1189 = vpack.c.b16 %v871, %v869
  %v1190 = vpack.c.b16 %v874, %v872
  %v1191 = vpack.c.b16 %v875, %v873
  %v1192 = vpack.c.b16 %v878, %v876
  %v1193 = vpack.c.b16 %v879, %v877
  %v1194 = vpack.c.b16 %v882, %v880
  %v1195 = vpack.c.b16 %v883, %v881
  %v1196 = vpack.c.b16 %v886, %v884
  %v1197 = vpack.c.b16 %v887, %v885
  %v1198 = vpack.c.b16 %v890, %v888
  %v1199 = vpack.c.b16 %v891, %v889
  %v1200 = vpack.c.b16 %v894, %v892
  %v1201 = vpack.c.b16 %v895, %v893
  %v1202 = vpack.c.b16 %v898, %v896
  %v1203 = vpack.c.b16 %v899, %v897
  %v1204 = vpack.c.b16 %v902, %v900
  %v1205 = vpack.c.b16 %v903, %v901
  %v1206 = vpack.c.b16 %v906, %v904
  %v1207 = vpack.c.b16 %v907, %v905
  %v1208 = vpack.c.b16 %v910, %v908
  %v1209 = vpack.c.b16 %v911, %v909
  %v1210 = vpack.c.b16 %v914, %v912
  %v1211 = vpack.c.b16 %v915, %v913
  %v1212 = vpack.c.b16 %v918, %v916
  %v1213 = vpack.c.b16 %v919, %v917
  %v1214 = vpack.c.b16 %v922, %v920
  %v1215 = vpack.c.b16 %v923, %v921
  %v1216 = vpack.c.b16 %v926, %v924
  %v1217 = vpack.c.b16 %v927, %v925
  %v1218 = vpack.c.b16 %v930, %v928
  %v1219 = vpack.c.b16 %v931, %v929
  %v1220 = vpack.c.b16 %v934, %v932
  %v1221 = vpack.c.b16 %v935, %v933
  %v1222 = vpack.c.b16 %v938, %v936
  %v1223 = vpack.c.b16 %v939, %v937
  %v1224 = vpack.c.b16 %v942, %v940
  %v1225 = vpack.c.b16 %v943, %v941
  %v1226 = vpack.c.b16 %v946, %v944
  %v1227 = vpack.c.b16 %v947, %v945
  %v1228 = vpack.c.b16 %v950, %v948
  %v1229 = vpack.c.b16 %v951, %v949
  %v1230 = vpack.c.b16 %v954, %v952
  %v1231 = vpack.c.b16 %v955, %v953
  %v1232 = vpack.c.b16 %v958, %v956
  %v1233 = vpack.c.b16 %v959, %v957
  %v1234 = vpack.c.b16 %v962, %v960
  %v1235 = vpack.c.b16 %v963, %v961
  %v1236 = vpack.c.b16 %v966, %v964
  %v1237 = vpack.c.b16 %v967, %v965
  %v1238 = vpack.c.b16 %v970, %v968
  %v1239 = vpack.c.b16 %v971, %v969
  %v1240 = vpack.c.b16 %v974, %v972
  %v1241 = vpack.c.b16 %v975, %v973
  %v1242 = vpack.c.b16 %v978, %v976
  %v1243 = vpack.c.b16 %v979, %v977
  %v1244 = vpack.c.b16 %v982, %v980
  %v1245 = vpack.c.b16 %v983, %v981
  %v1246 = vpack.c.b16 %v986, %v984
  %v1247 = vpack.c.b16 %v987, %v985
  %v1248 = vpack.c.b16 %v990, %v988
  %v1249 = vpack.c.b16 %v991, %v989
  %v1250 = vpack.c.b16 %v994, %v992
  %v1251 = vpack.c.b16 %v995, %v993
  %v1252 = vpack.c.b16 %v998, %v996
  %v1253 = vpack.c.b16 %v999, %v997
  %v1254 = vpack.c.b16 %v1002, %v1000
  %v1255 = vpack.c.b16 %v1003, %v1001
  %v1256 = vpack.c.b16 %v1006, %v1004
  %v1257 = vpack.c.b16 %v1007, %v1005
  %v1258 = vpack.c.b16 %v1010, %v1008
  %v1259 = vpack.c.b16 %v1011, %v1009
  %v1260 = vpack.c.b16 %v1014, %v1012
  %v1261 = vpack.c.b16 %v1015, %v1013
  %v1262 = vpack.c.b16 %v1018, %v1016
  %v1263 = vpack.c.b16 %v1019, %v1017
  %v1264 = vpack.c.b16 %v1022, %v1020
  %v1265 = vpack.c.b16 %v1023, %v1021
  %v1266 = vpack.c.b16 %v1026, %v1024
  %v1267 = vpack.c.b16 %v1027, %v1025
  %v1268 = vpack.c.b16 %v1030, %v1028
  %v1269 = vpack.c.b16 %v1031, %v1029
  %v1270 = vpack.c.b16 %v1034, %v1032
  %v1271 = vpack.c.b16 %v1035, %v1033
  %v1272 = vpack.c.b16 %v1038, %v1036
  %v1273 = vpack.c.b16 %v1039, %v1037
  %v1274 = vpack.c.b16 %v1042, %v1040
  %v1275 = vpack.c.b16 %v1043, %v1041
  %v1276 = vpack.c.b16 %v1046, %v1044
  %v1277 = vpack.c.b16 %v1047, %v1045
  %v1278 = vpack.c.b16 %v1050, %v1048
  %v1279 = vpack.c.b16 %v1051, %v1049
  %v1280 = vpack.c.b16 %v1054, %v1052
  %v1281 = vpack.c.b16 %v1055, %v1053
  %vm1508 = vcmask 130048
  %v1510 = vsel %vm1508, %v139, 0
  %1512 = vmatprep.subr.bf16.mxu0 %v1057
  %1513 = vmatpush1.bf16.msra.mxu0 %v1056
  %1514 = vmatprep.subr.bf16.mxu0 %v1059
  %1515 = vmatpush1.bf16.msra.mxu0 %v1058
  %1516 = vmatprep.subr.bf16.mxu0 %v1061
  %1517 = vmatpush1.bf16.msra.mxu0 %v1060
  %1518 = vmatprep.subr.bf16.mxu0 %v1063
  %1519 = vmatpush1.bf16.msra.mxu0 %v1062
  %1520 = vmatprep.subr.bf16.mxu0 %v1065
  %1521 = vmatpush1.bf16.msra.mxu0 %v1064
  %1522 = vmatprep.subr.bf16.mxu0 %v1067
  %1523 = vmatpush1.bf16.msra.mxu0 %v1066
  %1524 = vmatprep.subr.bf16.mxu0 %v1069
  %1525 = vmatpush1.bf16.msra.mxu0 %v1068
  %1526 = vmatprep.subr.bf16.mxu0 %v1071
  %1527 = vmatpush1.bf16.msra.mxu0 %v1070
  %1528 = vmatprep.subr.bf16.mxu0 %v1073
  %1529 = vmatpush1.bf16.msra.mxu0 %v1072
  %1530 = vmatprep.subr.bf16.mxu0 %v1075
  %1531 = vmatpush1.bf16.msra.mxu0 %v1074
  %1532 = vmatprep.subr.bf16.mxu0 %v1077
  %1533 = vmatpush1.bf16.msra.mxu0 %v1076
  %1534 = vmatprep.subr.bf16.mxu0 %v1079
  %1535 = vmatpush1.bf16.msra.mxu0 %v1078
  %1536 = vmatprep.subr.bf16.mxu0 %v1081
  %1537 = vmatpush1.bf16.msra.mxu0 %v1080
  %1538 = vmatprep.subr.bf16.mxu0 %v1083
  %1539 = vmatpush1.bf16.msra.mxu0 %v1082
  %1540 = vmatprep.subr.bf16.mxu0 %v1085
  %1541 = vmatpush1.bf16.msra.mxu0 %v1084
  %1542 = vmatprep.subr.bf16.mxu0 %v1087
  %1543 = vmatpush1.bf16.msra.mxu0 %v1086
  %1544 = vmatprep.mubr.bf16.mxu0 %v126
  %1545 = vmatmul.mubr.bf16.gmra.mrb[0].mxu0 %v125
  %v1546 = vpop.f32.mrb[0].mxu0
  %v1547 = vadd.f32 %v371, %v1546
  %v1548 = vpop.f32.mrb[0].mxu0
  %v1549 = vadd.f32 %v375, %v1548
  %v1550 = vpop.f32.mrb[0].mxu0
  %v1551 = vpop.f32.mrb[0].mxu0
  %1552 = vdwg.mxu0
  %1553 = vmatprep.subr.bf16.mxu0 %v1089
  %1554 = vmatpush1.bf16.msra.mxu0 %v1088
  %1555 = vmatprep.subr.bf16.mxu0 %v1091
  %1556 = vmatpush1.bf16.msra.mxu0 %v1090
  %1557 = vmatprep.subr.bf16.mxu0 %v1093
  %1558 = vmatpush1.bf16.msra.mxu0 %v1092
  %1559 = vmatprep.subr.bf16.mxu0 %v1095
  %1560 = vmatpush1.bf16.msra.mxu0 %v1094
  %1561 = vmatprep.subr.bf16.mxu0 %v1097
  %1562 = vmatpush1.bf16.msra.mxu0 %v1096
  %1563 = vmatprep.subr.bf16.mxu0 %v1099
  %1564 = vmatpush1.bf16.msra.mxu0 %v1098
  %1565 = vmatprep.subr.bf16.mxu0 %v1101
  %1566 = vmatpush1.bf16.msra.mxu0 %v1100
  %1567 = vmatprep.subr.bf16.mxu0 %v1103
  %1568 = vmatpush1.bf16.msra.mxu0 %v1102
  %1569 = vmatprep.subr.bf16.mxu0 %v1105
  %1570 = vmatpush1.bf16.msra.mxu0 %v1104
  %1571 = vmatprep.subr.bf16.mxu0 %v1107
  %1572 = vmatpush1.bf16.msra.mxu0 %v1106
  %1573 = vmatprep.subr.bf16.mxu0 %v1109
  %1574 = vmatpush1.bf16.msra.mxu0 %v1108
  %1575 = vmatprep.subr.bf16.mxu0 %v1111
  %1576 = vmatpush1.bf16.msra.mxu0 %v1110
  %1577 = vmatprep.subr.bf16.mxu0 %v1113
  %1578 = vmatpush1.bf16.msra.mxu0 %v1112
  %1579 = vmatprep.subr.bf16.mxu0 %v1115
  %1580 = vmatpush1.bf16.msra.mxu0 %v1114
  %1581 = vmatprep.subr.bf16.mxu0 %v1117
  %1582 = vmatpush1.bf16.msra.mxu0 %v1116
  %1583 = vmatprep.subr.bf16.mxu0 %v1119
  %1584 = vmatpush1.bf16.msra.mxu0 %v1118
  %1585 = vmatprep.mubr.bf16.mxu0 %v128
  %1586 = vmatmul.mubr.bf16.gmra.mrb[0].mxu0 %v127
  %v1587 = vpop.f32.mrb[0].mxu0
  %v1588 = vadd.f32 %v1547, %v1587
  %v1589 = vpop.f32.mrb[0].mxu0
  %v1590 = vadd.f32 %v1549, %v1589
  %v1591 = vpop.f32.mrb[0].mxu0
  %v1592 = vpop.f32.mrb[0].mxu0
  %1593 = vdwg.mxu0
  %1594 = vmatprep.subr.bf16.mxu0 %v1121
  %1595 = vmatpush1.bf16.msra.mxu0 %v1120
  %1596 = vmatprep.subr.bf16.mxu0 %v1123
  %1597 = vmatpush1.bf16.msra.mxu0 %v1122
  %1598 = vmatprep.subr.bf16.mxu0 %v1125
  %1599 = vmatpush1.bf16.msra.mxu0 %v1124
  %1600 = vmatprep.subr.bf16.mxu0 %v1127
  %1601 = vmatpush1.bf16.msra.mxu0 %v1126
  %1602 = vmatprep.subr.bf16.mxu0 %v1129
  %1603 = vmatpush1.bf16.msra.mxu0 %v1128
  %1604 = vmatprep.subr.bf16.mxu0 %v1131
  %1605 = vmatpush1.bf16.msra.mxu0 %v1130
  %1606 = vmatprep.subr.bf16.mxu0 %v1133
  %1607 = vmatpush1.bf16.msra.mxu0 %v1132
  %1608 = vmatprep.subr.bf16.mxu0 %v1135
  %1609 = vmatpush1.bf16.msra.mxu0 %v1134
  %1610 = vmatprep.subr.bf16.mxu0 %v1137
  %1611 = vmatpush1.bf16.msra.mxu0 %v1136
  %1612 = vmatprep.subr.bf16.mxu0 %v1139
  %1613 = vmatpush1.bf16.msra.mxu0 %v1138
  %1614 = vmatprep.subr.bf16.mxu0 %v1141
  %1615 = vmatpush1.bf16.msra.mxu0 %v1140
  %1616 = vmatprep.subr.bf16.mxu0 %v1143
  %1617 = vmatpush1.bf16.msra.mxu0 %v1142
  %1618 = vmatprep.subr.bf16.mxu0 %v1145
  %1619 = vmatpush1.bf16.msra.mxu0 %v1144
  %1620 = vmatprep.subr.bf16.mxu0 %v1147
  %1621 = vmatpush1.bf16.msra.mxu0 %v1146
  %1622 = vmatprep.subr.bf16.mxu0 %v1149
  %1623 = vmatpush1.bf16.msra.mxu0 %v1148
  %1624 = vmatprep.subr.bf16.mxu0 %v1151
  %1625 = vmatpush1.bf16.msra.mxu0 %v1150
  %1626 = vmatprep.mubr.bf16.mxu0 %v130
  %1627 = vmatmul.mubr.bf16.gmra.mrb[0].mxu0 %v129
  %v1628 = vpop.f32.mrb[0].mxu0
  %v1629 = vadd.f32 %v1588, %v1628
  %v1630 = vpop.f32.mrb[0].mxu0
  %v1631 = vadd.f32 %v1590, %v1630
  %v1632 = vpop.f32.mrb[0].mxu0
  %v1633 = vpop.f32.mrb[0].mxu0
  %1634 = vdwg.mxu0
  %1635 = vmatprep.subr.bf16.mxu0 %v1153
  %1636 = vmatpush1.bf16.msra.mxu0 %v1152
  %1637 = vmatprep.subr.bf16.mxu0 %v1155
  %1638 = vmatpush1.bf16.msra.mxu0 %v1154
  %1639 = vmatprep.subr.bf16.mxu0 %v1157
  %1640 = vmatpush1.bf16.msra.mxu0 %v1156
  %1641 = vmatprep.subr.bf16.mxu0 %v1159
  %1642 = vmatpush1.bf16.msra.mxu0 %v1158
  %1643 = vmatprep.subr.bf16.mxu0 %v1161
  %1644 = vmatpush1.bf16.msra.mxu0 %v1160
  %1645 = vmatprep.subr.bf16.mxu0 %v1163
  %1646 = vmatpush1.bf16.msra.mxu0 %v1162
  %1647 = vmatprep.subr.bf16.mxu0 %v1165
  %1648 = vmatpush1.bf16.msra.mxu0 %v1164
  %1649 = vmatprep.subr.bf16.mxu0 %v1167
  %1650 = vmatpush1.bf16.msra.mxu0 %v1166
  %1651 = vmatprep.subr.bf16.mxu0 %v1169
  %1652 = vmatpush1.bf16.msra.mxu0 %v1168
  %1653 = vmatprep.subr.bf16.mxu0 %v1171
  %1654 = vmatpush1.bf16.msra.mxu0 %v1170
  %1655 = vmatprep.subr.bf16.mxu0 %v1173
  %1656 = vmatpush1.bf16.msra.mxu0 %v1172
  %1657 = vmatprep.subr.bf16.mxu0 %v1175
  %1658 = vmatpush1.bf16.msra.mxu0 %v1174
  %1659 = vmatprep.subr.bf16.mxu0 %v1177
  %1660 = vmatpush1.bf16.msra.mxu0 %v1176
  %1661 = vmatprep.subr.bf16.mxu0 %v1179
  %1662 = vmatpush1.bf16.msra.mxu0 %v1178
  %1663 = vmatprep.subr.bf16.mxu0 %v1181
  %1664 = vmatpush1.bf16.msra.mxu0 %v1180
  %1665 = vmatprep.subr.bf16.mxu0 %v1183
  %1666 = vmatpush1.bf16.msra.mxu0 %v1182
  %1667 = vmatprep.mubr.bf16.mxu0 %v132
  %1668 = vmatmul.mubr.bf16.gmra.mrb[0].mxu0 %v131
  %v1669 = vpop.f32.mrb[0].mxu0
  %v1670 = vadd.f32 %v1629, %v1669
  %v1671 = vpop.f32.mrb[0].mxu0
  %v1672 = vadd.f32 %v1631, %v1671
  %v1673 = vpop.f32.mrb[0].mxu0
  %v1674 = vpop.f32.mrb[0].mxu0
  %1675 = vdwg.mxu0
  %1676 = vmatprep.subr.bf16.mxu0 %v1185
  %1677 = vmatpush1.bf16.msra.mxu0 %v1184
  %1678 = vmatprep.subr.bf16.mxu0 %v1187
  %1679 = vmatpush1.bf16.msra.mxu0 %v1186
  %1680 = vmatprep.subr.bf16.mxu0 %v1189
  %1681 = vmatpush1.bf16.msra.mxu0 %v1188
  %1682 = vmatprep.subr.bf16.mxu0 %v1191
  %1683 = vmatpush1.bf16.msra.mxu0 %v1190
  %1684 = vmatprep.subr.bf16.mxu0 %v1193
  %1685 = vmatpush1.bf16.msra.mxu0 %v1192
  %1686 = vmatprep.subr.bf16.mxu0 %v1195
  %1687 = vmatpush1.bf16.msra.mxu0 %v1194
  %1688 = vmatprep.subr.bf16.mxu0 %v1197
  %1689 = vmatpush1.bf16.msra.mxu0 %v1196
  %1690 = vmatprep.subr.bf16.mxu0 %v1199
  %1691 = vmatpush1.bf16.msra.mxu0 %v1198
  %1692 = vmatprep.subr.bf16.mxu0 %v1201
  %1693 = vmatpush1.bf16.msra.mxu0 %v1200
  %1694 = vmatprep.subr.bf16.mxu0 %v1203
  %1695 = vmatpush1.bf16.msra.mxu0 %v1202
  %1696 = vmatprep.subr.bf16.mxu0 %v1205
  %1697 = vmatpush1.bf16.msra.mxu0 %v1204
  %1698 = vmatprep.subr.bf16.mxu0 %v1207
  %1699 = vmatpush1.bf16.msra.mxu0 %v1206
  %1700 = vmatprep.subr.bf16.mxu0 %v1209
  %1701 = vmatpush1.bf16.msra.mxu0 %v1208
  %1702 = vmatprep.subr.bf16.mxu0 %v1211
  %1703 = vmatpush1.bf16.msra.mxu0 %v1210
  %1704 = vmatprep.subr.bf16.mxu0 %v1213
  %1705 = vmatpush1.bf16.msra.mxu0 %v1212
  %1706 = vmatprep.subr.bf16.mxu0 %v1215
  %1707 = vmatpush1.bf16.msra.mxu0 %v1214
  %1708 = vmatprep.mubr.bf16.mxu0 %v134
  %1709 = vmatmul.mubr.bf16.gmra.mrb[0].mxu0 %v133
  %v1710 = vpop.f32.mrb[0].mxu0
  %v1711 = vadd.f32 %v1670, %v1710
  %v1712 = vpop.f32.mrb[0].mxu0
  %v1713 = vadd.f32 %v1672, %v1712
  %v1714 = vpop.f32.mrb[0].mxu0
  %v1715 = vpop.f32.mrb[0].mxu0
  %1716 = vdwg.mxu0
  %1717 = vmatprep.subr.bf16.mxu0 %v1217
  %1718 = vmatpush1.bf16.msra.mxu0 %v1216
  %1719 = vmatprep.subr.bf16.mxu0 %v1219
  %1720 = vmatpush1.bf16.msra.mxu0 %v1218
  %1721 = vmatprep.subr.bf16.mxu0 %v1221
  %1722 = vmatpush1.bf16.msra.mxu0 %v1220
  %1723 = vmatprep.subr.bf16.mxu0 %v1223
  %1724 = vmatpush1.bf16.msra.mxu0 %v1222
  %1725 = vmatprep.subr.bf16.mxu0 %v1225
  %1726 = vmatpush1.bf16.msra.mxu0 %v1224
  %1727 = vmatprep.subr.bf16.mxu0 %v1227
  %1728 = vmatpush1.bf16.msra.mxu0 %v1226
  %1729 = vmatprep.subr.bf16.mxu0 %v1229
  %1730 = vmatpush1.bf16.msra.mxu0 %v1228
  %1731 = vmatprep.subr.bf16.mxu0 %v1231
  %1732 = vmatpush1.bf16.msra.mxu0 %v1230
  %1733 = vmatprep.subr.bf16.mxu0 %v1233
  %1734 = vmatpush1.bf16.msra.mxu0 %v1232
  %1735 = vmatprep.subr.bf16.mxu0 %v1235
  %1736 = vmatpush1.bf16.msra.mxu0 %v1234
  %1737 = vmatprep.subr.bf16.mxu0 %v1237
  %1738 = vmatpush1.bf16.msra.mxu0 %v1236
  %1739 = vmatprep.subr.bf16.mxu0 %v1239
  %1740 = vmatpush1.bf16.msra.mxu0 %v1238
  %1741 = vmatprep.subr.bf16.mxu0 %v1241
  %1742 = vmatpush1.bf16.msra.mxu0 %v1240
  %1743 = vmatprep.subr.bf16.mxu0 %v1243
  %1744 = vmatpush1.bf16.msra.mxu0 %v1242
  %1745 = vmatprep.subr.bf16.mxu0 %v1245
  %1746 = vmatpush1.bf16.msra.mxu0 %v1244
  %1747 = vmatprep.subr.bf16.mxu0 %v1247
  %1748 = vmatpush1.bf16.msra.mxu0 %v1246
  %1749 = vmatprep.mubr.bf16.mxu0 %v136
  %1750 = vmatmul.mubr.bf16.gmra.mrb[0].mxu0 %v135
  %v1751 = vpop.f32.mrb[0].mxu0
  %v1752 = vadd.f32 %v1711, %v1751
  %v1753 = vpop.f32.mrb[0].mxu0
  %v1754 = vadd.f32 %v1713, %v1753
  %v1755 = vpop.f32.mrb[0].mxu0
  %v1756 = vpop.f32.mrb[0].mxu0
  %1757 = vdwg.mxu0
  %1758 = vmatprep.subr.bf16.mxu0 %v1249
  %1759 = vmatpush1.bf16.msra.mxu0 %v1248
  %1760 = vmatprep.subr.bf16.mxu0 %v1251
  %1761 = vmatpush1.bf16.msra.mxu0 %v1250
  %1762 = vmatprep.subr.bf16.mxu0 %v1253
  %1763 = vmatpush1.bf16.msra.mxu0 %v1252
  %1764 = vmatprep.subr.bf16.mxu0 %v1255
  %1765 = vmatpush1.bf16.msra.mxu0 %v1254
  %1766 = vmatprep.subr.bf16.mxu0 %v1257
  %1767 = vmatpush1.bf16.msra.mxu0 %v1256
  %1768 = vmatprep.subr.bf16.mxu0 %v1259
  %1769 = vmatpush1.bf16.msra.mxu0 %v1258
  %1770 = vmatprep.subr.bf16.mxu0 %v1261
  %1771 = vmatpush1.bf16.msra.mxu0 %v1260
  %1772 = vmatprep.subr.bf16.mxu0 %v1263
  %1773 = vmatpush1.bf16.msra.mxu0 %v1262
  %1774 = vmatprep.subr.bf16.mxu0 %v1265
  %1775 = vmatpush1.bf16.msra.mxu0 %v1264
  %1776 = vmatprep.subr.bf16.mxu0 %v1267
  %1777 = vmatpush1.bf16.msra.mxu0 %v1266
  %1778 = vmatprep.subr.bf16.mxu0 %v1269
  %1779 = vmatpush1.bf16.msra.mxu0 %v1268
  %1780 = vmatprep.subr.bf16.mxu0 %v1271
  %1781 = vmatpush1.bf16.msra.mxu0 %v1270
  %1782 = vmatprep.subr.bf16.mxu0 %v1273
  %1783 = vmatpush1.bf16.msra.mxu0 %v1272
  %1784 = vmatprep.subr.bf16.mxu0 %v1275
  %1785 = vmatpush1.bf16.msra.mxu0 %v1274
  %1786 = vmatprep.subr.bf16.mxu0 %v1277
  %1787 = vmatpush1.bf16.msra.mxu0 %v1276
  %1788 = vmatprep.subr.bf16.mxu0 %v1279
  %1789 = vmatpush1.bf16.msra.mxu0 %v1278
  %1790 = vmatprep.mubr.bf16.mxu0 %v138
  %1791 = vmatmul.mubr.bf16.gmra.mrb[0].mxu0 %v137
  %v1792 = vpop.f32.mrb[0].mxu0
  %v1793 = vadd.f32 %v1752, %v1792
  %v1794 = vpop.f32.mrb[0].mxu0
  %v1795 = vadd.f32 %v1754, %v1794
  %v1796 = vpop.f32.mrb[0].mxu0
  %v1797 = vpop.f32.mrb[0].mxu0
  %1798 = vdwg.mxu0
  %1799 = vmatprep.subr.bf16.mxu0 %v1281
  %1800 = vmatpush1.bf16.msra.mxu0 %v1280
  %1801 = vmatprep.subr.bf16.mxu0 0
  %1802 = vmatpush1.bf16.msra.mxu0 0
  %1803 = vmatprep.subr.bf16.mxu0 0
  %1804 = vmatpush1.bf16.msra.mxu0 0
  %1805 = vmatprep.subr.bf16.mxu0 0
  %1806 = vmatpush1.bf16.msra.mxu0 0
  %1807 = vmatprep.subr.bf16.mxu0 0
  %1808 = vmatpush1.bf16.msra.mxu0 0
  %1809 = vmatprep.subr.bf16.mxu0 0
  %1810 = vmatpush1.bf16.msra.mxu0 0
  %1811 = vmatprep.subr.bf16.mxu0 0
  %1812 = vmatpush1.bf16.msra.mxu0 0
  %1813 = vmatprep.subr.bf16.mxu0 0
  %1814 = vmatpush1.bf16.msra.mxu0 0
  %1815 = vmatprep.subr.bf16.mxu0 0
  %1816 = vmatpush1.bf16.msra.mxu0 0
  %1817 = vmatprep.subr.bf16.mxu0 0
  %1818 = vmatpush1.bf16.msra.mxu0 0
  %1819 = vmatprep.subr.bf16.mxu0 0
  %1820 = vmatpush1.bf16.msra.mxu0 0
  %1821 = vmatprep.subr.bf16.mxu0 0
  %1822 = vmatpush1.bf16.msra.mxu0 0
  %1823 = vmatprep.subr.bf16.mxu0 0
  %1824 = vmatpush1.bf16.msra.mxu0 0
  %1825 = vmatprep.subr.bf16.mxu0 0
  %1826 = vmatpush1.bf16.msra.mxu0 0
  %1827 = vmatprep.subr.bf16.mxu0 0
  %1828 = vmatpush1.bf16.msra.mxu0 0
  %1829 = vmatprep.subr.bf16.mxu0 0
  %1830 = vmatpush1.bf16.msra.mxu0 0
  %1831 = vmatprep.mubr.bf16.mxu0 0
  %1832 = vmatmul.mubr.bf16.gmra.mrb[0].mxu0 %v1510
  %v1833 = vpop.f32.mrb[0].mxu0
  %v1834 = vadd.f32 %v1793, %v1833
  %v1835 = vpop.f32.mrb[0].mxu0
  %v1836 = vadd.f32 %v1795, %v1835
  %v1837 = vpop.f32.mrb[0].mxu0
  %v1838 = vpop.f32.mrb[0].mxu0
  %1839 = vdwg.mxu0
  %vm1840 = vcmp.gt.f32.partialorder %v1834, 0.0
  %vm1841 = vcmp.gt.f32.partialorder %v1836, 0.0
  %v1842 = vmul.f32 %v1834, 0.1
  %v1843 = vmul.f32 %v1836, 0.1
  %v1844 = vsel %vm1840, %v1834, %v1842
  %v1845 = vsel %vm1841, %v1836, %v1843
  %v1846 = vld [vmem:[%s1] sm:$0xff]
  %v1847 = vld [vmem:[%s1 + $0x8] sm:$0xff]
  %v1848 = vld [vmem:[%s1 + $0x10] sm:$0xff]
  %v1849 = vld [vmem:[%s1 + $0x18] sm:$0x3]
  %v1854 = vcombine.high %v1846, %v1846
  %v1856 = vunpack.c.l.s4 1983009808
  %v1857 = vunpack.c.0.s8 %v1856
  %v1858 = vlaneseq
  %v1859 = vshrl.u32 %v1858, 7
  %v1860 = vsub.s32 %v1857, %v1859
  %v1861 = vrot.slane %v1846, %v1860
  %v1863 = vunpack.c.l.s4 1983009808
  %v1864 = vunpack.c.0.s8 %v1863
  %v1865 = vlaneseq
  %v1866 = vshrl.u32 %v1865, 7
  %v1867 = vsub.s32 %v1864, %v1866
  %v1868 = vrot.slane %v1854, %v1867
  %v1869 = vcombine.high %v1861, %v1861
  %v1870 = vcombine.high %v1868, %v1868
  %v1871 = vcombine.high %v1847, %v1847
  %v1873 = vunpack.c.l.s4 1983009808
  %v1874 = vunpack.c.0.s8 %v1873
  %v1875 = vlaneseq
  %v1876 = vshrl.u32 %v1875, 7
  %v1877 = vsub.s32 %v1874, %v1876
  %v1878 = vrot.slane %v1847, %v1877
  %v1880 = vunpack.c.l.s4 1983009808
  %v1881 = vunpack.c.0.s8 %v1880
  %v1882 = vlaneseq
  %v1883 = vshrl.u32 %v1882, 7
  %v1884 = vsub.s32 %v1881, %v1883
  %v1885 = vrot.slane %v1871, %v1884
  %v1886 = vcombine.high %v1878, %v1878
  %v1887 = vcombine.high %v1885, %v1885
  %v1888 = vcombine.high %v1848, %v1848
  %v1890 = vunpack.c.l.s4 1983009808
  %v1891 = vunpack.c.0.s8 %v1890
  %v1892 = vlaneseq
  %v1893 = vshrl.u32 %v1892, 7
  %v1894 = vsub.s32 %v1891, %v1893
  %v1895 = vrot.slane %v1848, %v1894
  %v1897 = vunpack.c.l.s4 1983009808
  %v1898 = vunpack.c.0.s8 %v1897
  %v1899 = vlaneseq
  %v1900 = vshrl.u32 %v1899, 7
  %v1901 = vsub.s32 %v1898, %v1900
  %v1902 = vrot.slane %v1888, %v1901
  %v1903 = vcombine.high %v1895, %v1895
  %v1904 = vcombine.high %v1902, %v1902
  %v1906 = vunpack.c.l.s4 1983009808
  %v1907 = vunpack.c.0.s8 %v1906
  %v1908 = vlaneseq
  %v1909 = vshrl.u32 %v1908, 7
  %v1910 = vsub.s32 %v1907, %v1909
  %v1911 = vrot.slane %v1849, %v1910
  %v1925 = vpack.c.bf16 %v1861, %v1861
  %v1926 = vpack.c.bf16 %v1869, %v1869
  %v1927 = vpack.c.bf16 %v1868, %v1868
  %v1928 = vpack.c.bf16 %v1870, %v1870
  %v1929 = vpack.c.bf16 %v1878, %v1878
  %v1930 = vpack.c.bf16 %v1886, %v1886
  %v1931 = vpack.c.bf16 %v1885, %v1885
  %v1932 = vpack.c.bf16 %v1887, %v1887
  %v1933 = vpack.c.bf16 %v1895, %v1895
  %v1934 = vpack.c.bf16 %v1903, %v1903
  %v1935 = vpack.c.bf16 %v1902, %v1902
  %v1936 = vpack.c.bf16 %v1904, %v1904
  %v1937 = vpack.c.bf16 %v1911, %v1911
  %v1938 = vld [vmem:[%s4] sm:$0xff]
  %v1939 = vld [vmem:[%s4 + $0x8] sm:$0xff]
  %v1940 = vld [vmem:[%s4 + $0x10] sm:$0xff]
  %v1941 = vld [vmem:[%s4 + $0x18] sm:$0xff]
  %v1942 = vld [vmem:[%s4 + $0x20] sm:$0xff]
  %v1943 = vld [vmem:[%s4 + $0x28] sm:$0xff]
  %v1944 = vld [vmem:[%s4 + $0x30] sm:$0xff]
  %v1945 = vld [vmem:[%s4 + $0x38] sm:$0xff]
  %v1946 = vld [vmem:[%s4 + $0x40] sm:$0xff]
  %v1947 = vld [vmem:[%s4 + $0x48] sm:$0xff]
  %v1948 = vld [vmem:[%s4 + $0x50] sm:$0xff]
  %v1949 = vld [vmem:[%s4 + $0x58] sm:$0xff]
  %v1950 = vld [vmem:[%s4 + $0x60] sm:$0xff]
  %v1951 = vld [vmem:[%s4 + $0x68] sm:$0xff]
  %v1952 = vld [vmem:[%s4 + $0x70] sm:$0xff]
  %v1953 = vld [vmem:[%s4 + $0x78] sm:$0xff]
  %v1954 = vld [vmem:[%s4 + $0x80] sm:$0xff]
  %v1955 = vld [vmem:[%s4 + $0x88] sm:$0xff]
  %v1956 = vld [vmem:[%s4 + $0x90] sm:$0xff]
  %v1957 = vld [vmem:[%s4 + $0x98] sm:$0xff]
  %v1958 = vld [vmem:[%s4 + $0xa0] sm:$0xff]
  %v1959 = vld [vmem:[%s4 + $0xa8] sm:$0xff]
  %v1960 = vld [vmem:[%s4 + $0xb0] sm:$0xff]
  %v1961 = vld [vmem:[%s4 + $0xb8] sm:$0xff]
  %v1962 = vld [vmem:[%s4 + $0xc0] sm:$0xff]
  %v1963 = vld [vmem:[%s4 + $0xc8] sm:$0xff]
  %v1964 = vld [vmem:[%s4 + $0xd0] sm:$0xff]
  %v1965 = vld [vmem:[%s4 + $0xd8] sm:$0xff]
  %v1966 = vld [vmem:[%s4 + $0xe0] sm:$0xff]
  %v1967 = vld [vmem:[%s4 + $0xe8] sm:$0xff]
  %v1968 = vld [vmem:[%s4 + $0xf0] sm:$0xff]
  %v1969 = vld [vmem:[%s4 + $0xf8] sm:$0xff]
  %v1970 = vld [vmem:[%s4 + $0x100] sm:$0xff]
  %v1971 = vld [vmem:[%s4 + $0x108] sm:$0xff]
  %v1972 = vld [vmem:[%s4 + $0x110] sm:$0xff]
  %v1973 = vld [vmem:[%s4 + $0x118] sm:$0xff]
  %v1974 = vld [vmem:[%s4 + $0x120] sm:$0xff]
  %v1975 = vld [vmem:[%s4 + $0x128] sm:$0xff]
  %v1976 = vld [vmem:[%s4 + $0x130] sm:$0xff]
  %v1977 = vld [vmem:[%s4 + $0x138] sm:$0xff]
  %v1978 = vld [vmem:[%s4 + $0x140] sm:$0xff]
  %v1979 = vld [vmem:[%s4 + $0x148] sm:$0xff]
  %v1980 = vld [vmem:[%s4 + $0x150] sm:$0xff]
  %v1981 = vld [vmem:[%s4 + $0x158] sm:$0xff]
  %v1982 = vld [vmem:[%s4 + $0x160] sm:$0xff]
  %v1983 = vld [vmem:[%s4 + $0x168] sm:$0xff]
  %v1984 = vld [vmem:[%s4 + $0x170] sm:$0xff]
  %v1985 = vld [vmem:[%s4 + $0x178] sm:$0xff]
  %v1986 = vld [vmem:[%s4 + $0x180] sm:$0xff]
  %v1987 = vld [vmem:[%s4 + $0x188] sm:$0xff]
  %v1988 = vld [vmem:[%s4 + $0x190] sm:$0xff]
  %v1989 = vld [vmem:[%s4 + $0x198] sm:$0xff]
  %v1990 = vld [vmem:[%s4 + $0x1a0] sm:$0xff]
  %v1991 = vld [vmem:[%s4 + $0x1a8] sm:$0xff]
  %v1992 = vld [vmem:[%s4 + $0x1b0] sm:$0xff]
  %v1993 = vld [vmem:[%s4 + $0x1b8] sm:$0xff]
  %v1994 = vld [vmem:[%s4 + $0x1c0] sm:$0xff]
  %v1995 = vld [vmem:[%s4 + $0x1c8] sm:$0xff]
  %v1996 = vld [vmem:[%s4 + $0x1d0] sm:$0xff]
  %v1997 = vld [vmem:[%s4 + $0x1d8] sm:$0xff]
  %v1998 = vld [vmem:[%s4 + $0x1e0] sm:$0xff]
  %v1999 = vld [vmem:[%s4 + $0x1e8] sm:$0xff]
  %v2000 = vld [vmem:[%s4 + $0x1f0] sm:$0xff]
  %v2001 = vld [vmem:[%s4 + $0x1f8] sm:$0xff]
  %v2002 = vld [vmem:[%s4 + $0x200] sm:$0xff]
  %v2003 = vld [vmem:[%s4 + $0x208] sm:$0xff]
  %v2004 = vld [vmem:[%s4 + $0x210] sm:$0xff]
  %v2005 = vld [vmem:[%s4 + $0x218] sm:$0xff]
  %v2006 = vld [vmem:[%s4 + $0x220] sm:$0xff]
  %v2007 = vld [vmem:[%s4 + $0x228] sm:$0xff]
  %v2008 = vld [vmem:[%s4 + $0x230] sm:$0xff]
  %v2009 = vld [vmem:[%s4 + $0x238] sm:$0xff]
  %v2010 = vld [vmem:[%s4 + $0x240] sm:$0xff]
  %v2011 = vld [vmem:[%s4 + $0x248] sm:$0xff]
  %v2012 = vld [vmem:[%s4 + $0x250] sm:$0xff]
  %v2013 = vld [vmem:[%s4 + $0x258] sm:$0xff]
  %v2014 = vld [vmem:[%s4 + $0x260] sm:$0xff]
  %v2015 = vld [vmem:[%s4 + $0x268] sm:$0xff]
  %v2016 = vld [vmem:[%s4 + $0x270] sm:$0xff]
  %v2017 = vld [vmem:[%s4 + $0x278] sm:$0xff]
  %v2018 = vld [vmem:[%s4 + $0x280] sm:$0xff]
  %v2019 = vld [vmem:[%s4 + $0x288] sm:$0xff]
  %v2020 = vld [vmem:[%s4 + $0x290] sm:$0xff]
  %v2021 = vld [vmem:[%s4 + $0x298] sm:$0xff]
  %v2022 = vld [vmem:[%s4 + $0x2a0] sm:$0xff]
  %v2023 = vld [vmem:[%s4 + $0x2a8] sm:$0xff]
  %v2024 = vld [vmem:[%s4 + $0x2b0] sm:$0xff]
  %v2025 = vld [vmem:[%s4 + $0x2b8] sm:$0xff]
  %v2026 = vld [vmem:[%s4 + $0x2c0] sm:$0xff]
  %v2027 = vld [vmem:[%s4 + $0x2c8] sm:$0xff]
  %v2028 = vld [vmem:[%s4 + $0x2d0] sm:$0xff]
  %v2029 = vld [vmem:[%s4 + $0x2d8] sm:$0xff]
  %v2030 = vld [vmem:[%s4 + $0x2e0] sm:$0xff]
  %v2031 = vld [vmem:[%s4 + $0x2e8] sm:$0xff]
  %v2032 = vld [vmem:[%s4 + $0x2f0] sm:$0xff]
  %v2033 = vld [vmem:[%s4 + $0x2f8] sm:$0xff]
  %v2034 = vld [vmem:[%s4 + $0x300] sm:$0xff]
  %v2035 = vld [vmem:[%s4 + $0x308] sm:$0xff]
  %v2036 = vld [vmem:[%s4 + $0x310] sm:$0xff]
  %v2037 = vld [vmem:[%s4 + $0x318] sm:$0xff]
  %v2038 = vld [vmem:[%s4 + $0x320] sm:$0xff]
  %v2039 = vld [vmem:[%s4 + $0x328] sm:$0xff]
  %v2040 = vld [vmem:[%s4 + $0x330] sm:$0xff]
  %v2041 = vld [vmem:[%s4 + $0x338] sm:$0xff]
  %v2042 = vld [vmem:[%s4 + $0x340] sm:$0xff]
  %v2043 = vld [vmem:[%s4 + $0x348] sm:$0xff]
  %v2044 = vld [vmem:[%s4 + $0x350] sm:$0xff]
  %v2045 = vld [vmem:[%s4 + $0x358] sm:$0xff]
  %v2046 = vld [vmem:[%s4 + $0x360] sm:$0xff]
  %v2047 = vld [vmem:[%s4 + $0x368] sm:$0xff]
  %v2048 = vld [vmem:[%s4 + $0x370] sm:$0xff]
  %v2049 = vld [vmem:[%s4 + $0x378] sm:$0xff]
  %v2050 = vld [vmem:[%s4 + $0x380] sm:$0xff]
  %v2051 = vld [vmem:[%s4 + $0x388] sm:$0xff]
  %v2052 = vld [vmem:[%s4 + $0x390] sm:$0xff]
  %v2053 = vld [vmem:[%s4 + $0x398] sm:$0xff]
  %v2054 = vld [vmem:[%s4 + $0x3a0] sm:$0xff]
  %v2055 = vld [vmem:[%s4 + $0x3a8] sm:$0xff]
  %v2056 = vld [vmem:[%s4 + $0x3b0] sm:$0xff]
  %v2057 = vld [vmem:[%s4 + $0x3b8] sm:$0xff]
  %v2058 = vld [vmem:[%s4 + $0x3c0] sm:$0xff]
  %v2059 = vld [vmem:[%s4 + $0x3c8] sm:$0xff]
  %v2060 = vld [vmem:[%s4 + $0x3d0] sm:$0xff]
  %v2061 = vld [vmem:[%s4 + $0x3d8] sm:$0xff]
  %v2062 = vld [vmem:[%s4 + $0x3e0] sm:$0xff]
  %v2063 = vld [vmem:[%s4 + $0x3e8] sm:$0xff]
  %v2064 = vld [vmem:[%s4 + $0x3f0] sm:$0xff]
  %v2065 = vld [vmem:[%s4 + $0x3f8] sm:$0xff]
  %v2066 = vld [vmem:[%s4 + $0x400] sm:$0xff]
  %v2067 = vld [vmem:[%s4 + $0x408] sm:$0xff]
  %v2068 = vld [vmem:[%s4 + $0x410] sm:$0xff]
  %v2069 = vld [vmem:[%s4 + $0x418] sm:$0xff]
  %v2070 = vld [vmem:[%s4 + $0x420] sm:$0xff]
  %v2071 = vld [vmem:[%s4 + $0x428] sm:$0xff]
  %v2072 = vld [vmem:[%s4 + $0x430] sm:$0xff]
  %v2073 = vld [vmem:[%s4 + $0x438] sm:$0xff]
  %v2074 = vld [vmem:[%s4 + $0x440] sm:$0xff]
  %v2075 = vld [vmem:[%s4 + $0x448] sm:$0xff]
  %v2076 = vld [vmem:[%s4 + $0x450] sm:$0xff]
  %v2077 = vld [vmem:[%s4 + $0x458] sm:$0xff]
  %v2078 = vld [vmem:[%s4 + $0x460] sm:$0xff]
  %v2079 = vld [vmem:[%s4 + $0x468] sm:$0xff]
  %v2080 = vld [vmem:[%s4 + $0x470] sm:$0xff]
  %v2081 = vld [vmem:[%s4 + $0x478] sm:$0xff]
  %v2082 = vld [vmem:[%s4 + $0x480] sm:$0xff]
  %v2083 = vld [vmem:[%s4 + $0x488] sm:$0xff]
  %v2084 = vld [vmem:[%s4 + $0x490] sm:$0xff]
  %v2085 = vld [vmem:[%s4 + $0x498] sm:$0xff]
  %v2086 = vld [vmem:[%s4 + $0x4a0] sm:$0xff]
  %v2087 = vld [vmem:[%s4 + $0x4a8] sm:$0xff]
  %v2088 = vld [vmem:[%s4 + $0x4b0] sm:$0xff]
  %v2089 = vld [vmem:[%s4 + $0x4b8] sm:$0xff]
  %v2090 = vld [vmem:[%s4 + $0x4c0] sm:$0xff]
  %v2091 = vld [vmem:[%s4 + $0x4c8] sm:$0xff]
  %v2092 = vld [vmem:[%s4 + $0x4d0] sm:$0xff]
  %v2093 = vld [vmem:[%s4 + $0x4d8] sm:$0xff]
  %v2094 = vld [vmem:[%s4 + $0x4e0] sm:$0xff]
  %v2095 = vld [vmem:[%s4 + $0x4e8] sm:$0xff]
  %v2096 = vld [vmem:[%s4 + $0x4f0] sm:$0xff]
  %v2097 = vld [vmem:[%s4 + $0x4f8] sm:$0xff]
  %v2098 = vld [vmem:[%s4 + $0x500] sm:$0xff]
  %v2099 = vld [vmem:[%s4 + $0x508] sm:$0xff]
  %v2100 = vld [vmem:[%s4 + $0x510] sm:$0xff]
  %v2101 = vld [vmem:[%s4 + $0x518] sm:$0xff]
  %v2102 = vld [vmem:[%s4 + $0x520] sm:$0xff]
  %v2103 = vld [vmem:[%s4 + $0x528] sm:$0xff]
  %v2104 = vld [vmem:[%s4 + $0x530] sm:$0xff]
  %v2105 = vld [vmem:[%s4 + $0x538] sm:$0xff]
  %v2106 = vld [vmem:[%s4 + $0x540] sm:$0xff]
  %v2107 = vld [vmem:[%s4 + $0x548] sm:$0xff]
  %v2108 = vld [vmem:[%s4 + $0x550] sm:$0xff]
  %v2109 = vld [vmem:[%s4 + $0x558] sm:$0xff]
  %v2110 = vld [vmem:[%s4 + $0x560] sm:$0xff]
  %v2111 = vld [vmem:[%s4 + $0x568] sm:$0xff]
  %v2112 = vld [vmem:[%s4 + $0x570] sm:$0xff]
  %v2113 = vld [vmem:[%s4 + $0x578] sm:$0xff]
  %v2114 = vld [vmem:[%s4 + $0x580] sm:$0xff]
  %v2115 = vld [vmem:[%s4 + $0x588] sm:$0xff]
  %v2116 = vld [vmem:[%s4 + $0x590] sm:$0xff]
  %v2117 = vld [vmem:[%s4 + $0x598] sm:$0xff]
  %v2118 = vld [vmem:[%s4 + $0x5a0] sm:$0xff]
  %v2119 = vld [vmem:[%s4 + $0x5a8] sm:$0xff]
  %v2120 = vld [vmem:[%s4 + $0x5b0] sm:$0xff]
  %v2121 = vld [vmem:[%s4 + $0x5b8] sm:$0xff]
  %v2122 = vld [vmem:[%s4 + $0x5c0] sm:$0xff]
  %v2123 = vld [vmem:[%s4 + $0x5c8] sm:$0xff]
  %v2124 = vld [vmem:[%s4 + $0x5d0] sm:$0xff]
  %v2125 = vld [vmem:[%s4 + $0x5d8] sm:$0xff]
  %v2126 = vld [vmem:[%s4 + $0x5e0] sm:$0xff]
  %v2127 = vld [vmem:[%s4 + $0x5e8] sm:$0xff]
  %v2128 = vld [vmem:[%s4 + $0x5f0] sm:$0xff]
  %v2129 = vld [vmem:[%s4 + $0x5f8] sm:$0xff]
  %v2130 = vld [vmem:[%s4 + $0x600] sm:$0xff]
  %v2131 = vld [vmem:[%s4 + $0x608] sm:$0xff]
  %v2132 = vld [vmem:[%s4 + $0x610] sm:$0xff]
  %v2133 = vld [vmem:[%s4 + $0x618] sm:$0xff]
  %v2134 = vld [vmem:[%s4 + $0x620] sm:$0xff]
  %v2135 = vld [vmem:[%s4 + $0x628] sm:$0xff]
  %v2136 = vld [vmem:[%s4 + $0x630] sm:$0xff]
  %v2137 = vld [vmem:[%s4 + $0x638] sm:$0xff]
  %v2138 = vld [vmem:[%s5] sm:$0x3]
  %v2140 = vlaneseq
  %v2141 = vshrl.u32 %v2140, 7
  %v2142 = vsub.s32 0, %v2141
  %v2143 = vrot.slane %v2138, %v2142
  %v2144 = vlaneseq
  %v2145 = vshrl.u32 %v2144, 7
  %v2146 = vsub.s32 1, %v2145
  %v2147 = vrot.slane %v2138, %v2146
  %v2350 = vunpack.c.l.b16 %v1938
  %v2351 = vunpack.c.h.b16 %v1938
  %v2352 = vunpack.c.l.b16 %v1939
  %v2353 = vunpack.c.h.b16 %v1939
  %v2354 = vunpack.c.l.b16 %v1940
  %v2355 = vunpack.c.h.b16 %v1940
  %v2356 = vunpack.c.l.b16 %v1941
  %v2357 = vunpack.c.h.b16 %v1941
  %v2358 = vunpack.c.l.b16 %v1942
  %v2359 = vunpack.c.h.b16 %v1942
  %v2360 = vunpack.c.l.b16 %v1943
  %v2361 = vunpack.c.h.b16 %v1943
  %v2362 = vunpack.c.l.b16 %v1944
  %v2363 = vunpack.c.h.b16 %v1944
  %v2364 = vunpack.c.l.b16 %v1945
  %v2365 = vunpack.c.h.b16 %v1945
  %v2366 = vunpack.c.l.b16 %v1946
  %v2367 = vunpack.c.h.b16 %v1946
  %v2368 = vunpack.c.l.b16 %v1947
  %v2369 = vunpack.c.h.b16 %v1947
  %v2370 = vunpack.c.l.b16 %v1948
  %v2371 = vunpack.c.h.b16 %v1948
  %v2372 = vunpack.c.l.b16 %v1949
  %v2373 = vunpack.c.h.b16 %v1949
  %v2374 = vunpack.c.l.b16 %v1950
  %v2375 = vunpack.c.h.b16 %v1950
  %v2376 = vunpack.c.l.b16 %v1951
  %v2377 = vunpack.c.h.b16 %v1951
  %v2378 = vunpack.c.l.b16 %v1952
  %v2379 = vunpack.c.h.b16 %v1952
  %v2380 = vunpack.c.l.b16 %v1953
  %v2381 = vunpack.c.h.b16 %v1953
  %v2382 = vunpack.c.l.b16 %v1954
  %v2383 = vunpack.c.h.b16 %v1954
  %v2384 = vunpack.c.l.b16 %v1955
  %v2385 = vunpack.c.h.b16 %v1955
  %v2386 = vunpack.c.l.b16 %v1956
  %v2387 = vunpack.c.h.b16 %v1956
  %v2388 = vunpack.c.l.b16 %v1957
  %v2389 = vunpack.c.h.b16 %v1957
  %v2390 = vunpack.c.l.b16 %v1958
  %v2391 = vunpack.c.h.b16 %v1958
  %v2392 = vunpack.c.l.b16 %v1959
  %v2393 = vunpack.c.h.b16 %v1959
  %v2394 = vunpack.c.l.b16 %v1960
  %v2395 = vunpack.c.h.b16 %v1960
  %v2396 = vunpack.c.l.b16 %v1961
  %v2397 = vunpack.c.h.b16 %v1961
  %v2398 = vunpack.c.l.b16 %v1962
  %v2399 = vunpack.c.h.b16 %v1962
  %v2400 = vunpack.c.l.b16 %v1963
  %v2401 = vunpack.c.h.b16 %v1963
  %v2402 = vunpack.c.l.b16 %v1964
  %v2403 = vunpack.c.h.b16 %v1964
  %v2404 = vunpack.c.l.b16 %v1965
  %v2405 = vunpack.c.h.b16 %v1965
  %v2406 = vunpack.c.l.b16 %v1966
  %v2407 = vunpack.c.h.b16 %v1966
  %v2408 = vunpack.c.l.b16 %v1967
  %v2409 = vunpack.c.h.b16 %v1967
  %v2410 = vunpack.c.l.b16 %v1968
  %v2411 = vunpack.c.h.b16 %v1968
  %v2412 = vunpack.c.l.b16 %v1969
  %v2413 = vunpack.c.h.b16 %v1969
  %v2414 = vunpack.c.l.b16 %v1970
  %v2415 = vunpack.c.h.b16 %v1970
  %v2416 = vunpack.c.l.b16 %v1971
  %v2417 = vunpack.c.h.b16 %v1971
  %v2418 = vunpack.c.l.b16 %v1972
  %v2419 = vunpack.c.h.b16 %v1972
  %v2420 = vunpack.c.l.b16 %v1973
  %v2421 = vunpack.c.h.b16 %v1973
  %v2422 = vunpack.c.l.b16 %v1974
  %v2423 = vunpack.c.h.b16 %v1974
  %v2424 = vunpack.c.l.b16 %v1975
  %v2425 = vunpack.c.h.b16 %v1975
  %v2426 = vunpack.c.l.b16 %v1976
  %v2427 = vunpack.c.h.b16 %v1976
  %v2428 = vunpack.c.l.b16 %v1977
  %v2429 = vunpack.c.h.b16 %v1977
  %v2430 = vunpack.c.l.b16 %v1978
  %v2431 = vunpack.c.h.b16 %v1978
  %v2432 = vunpack.c.l.b16 %v1979
  %v2433 = vunpack.c.h.b16 %v1979
  %v2434 = vunpack.c.l.b16 %v1980
  %v2435 = vunpack.c.h.b16 %v1980
  %v2436 = vunpack.c.l.b16 %v1981
  %v2437 = vunpack.c.h.b16 %v1981
  %v2438 = vunpack.c.l.b16 %v1982
  %v2439 = vunpack.c.h.b16 %v1982
  %v2440 = vunpack.c.l.b16 %v1983
  %v2441 = vunpack.c.h.b16 %v1983
  %v2442 = vunpack.c.l.b16 %v1984
  %v2443 = vunpack.c.h.b16 %v1984
  %v2444 = vunpack.c.l.b16 %v1985
  %v2445 = vunpack.c.h.b16 %v1985
  %v2446 = vunpack.c.l.b16 %v1986
  %v2447 = vunpack.c.h.b16 %v1986
  %v2448 = vunpack.c.l.b16 %v1987
  %v2449 = vunpack.c.h.b16 %v1987
  %v2450 = vunpack.c.l.b16 %v1988
  %v2451 = vunpack.c.h.b16 %v1988
  %v2452 = vunpack.c.l.b16 %v1989
  %v2453 = vunpack.c.h.b16 %v1989
  %v2454 = vunpack.c.l.b16 %v1990
  %v2455 = vunpack.c.h.b16 %v1990
  %v2456 = vunpack.c.l.b16 %v1991
  %v2457 = vunpack.c.h.b16 %v1991
  %v2458 = vunpack.c.l.b16 %v1992
  %v2459 = vunpack.c.h.b16 %v1992
  %v2460 = vunpack.c.l.b16 %v1993
  %v2461 = vunpack.c.h.b16 %v1993
  %v2462 = vunpack.c.l.b16 %v1994
  %v2463 = vunpack.c.h.b16 %v1994
  %v2464 = vunpack.c.l.b16 %v1995
  %v2465 = vunpack.c.h.b16 %v1995
  %v2466 = vunpack.c.l.b16 %v1996
  %v2467 = vunpack.c.h.b16 %v1996
  %v2468 = vunpack.c.l.b16 %v1997
  %v2469 = vunpack.c.h.b16 %v1997
  %v2470 = vunpack.c.l.b16 %v1998
  %v2471 = vunpack.c.h.b16 %v1998
  %v2472 = vunpack.c.l.b16 %v1999
  %v2473 = vunpack.c.h.b16 %v1999
  %v2474 = vunpack.c.l.b16 %v2000
  %v2475 = vunpack.c.h.b16 %v2000
  %v2476 = vunpack.c.l.b16 %v2001
  %v2477 = vunpack.c.h.b16 %v2001
  %v2478 = vunpack.c.l.b16 %v2002
  %v2479 = vunpack.c.h.b16 %v2002
  %v2480 = vunpack.c.l.b16 %v2003
  %v2481 = vunpack.c.h.b16 %v2003
  %v2482 = vunpack.c.l.b16 %v2004
  %v2483 = vunpack.c.h.b16 %v2004
  %v2484 = vunpack.c.l.b16 %v2005
  %v2485 = vunpack.c.h.b16 %v2005
  %v2486 = vunpack.c.l.b16 %v2006
  %v2487 = vunpack.c.h.b16 %v2006
  %v2488 = vunpack.c.l.b16 %v2007
  %v2489 = vunpack.c.h.b16 %v2007
  %v2490 = vunpack.c.l.b16 %v2008
  %v2491 = vunpack.c.h.b16 %v2008
  %v2492 = vunpack.c.l.b16 %v2009
  %v2493 = vunpack.c.h.b16 %v2009
  %v2494 = vunpack.c.l.b16 %v2010
  %v2495 = vunpack.c.h.b16 %v2010
  %v2496 = vunpack.c.l.b16 %v2011
  %v2497 = vunpack.c.h.b16 %v2011
  %v2498 = vunpack.c.l.b16 %v2012
  %v2499 = vunpack.c.h.b16 %v2012
  %v2500 = vunpack.c.l.b16 %v2013
  %v2501 = vunpack.c.h.b16 %v2013
  %v2502 = vunpack.c.l.b16 %v2014
  %v2503 = vunpack.c.h.b16 %v2014
  %v2504 = vunpack.c.l.b16 %v2015
  %v2505 = vunpack.c.h.b16 %v2015
  %v2506 = vunpack.c.l.b16 %v2016
  %v2507 = vunpack.c.h.b16 %v2016
  %v2508 = vunpack.c.l.b16 %v2017
  %v2509 = vunpack.c.h.b16 %v2017
  %v2510 = vunpack.c.l.b16 %v2018
  %v2511 = vunpack.c.h.b16 %v2018
  %v2512 = vunpack.c.l.b16 %v2019
  %v2513 = vunpack.c.h.b16 %v2019
  %v2514 = vunpack.c.l.b16 %v2020
  %v2515 = vunpack.c.h.b16 %v2020
  %v2516 = vunpack.c.l.b16 %v2021
  %v2517 = vunpack.c.h.b16 %v2021
  %v2518 = vunpack.c.l.b16 %v2022
  %v2519 = vunpack.c.h.b16 %v2022
  %v2520 = vunpack.c.l.b16 %v2023
  %v2521 = vunpack.c.h.b16 %v2023
  %v2522 = vunpack.c.l.b16 %v2024
  %v2523 = vunpack.c.h.b16 %v2024
  %v2524 = vunpack.c.l.b16 %v2025
  %v2525 = vunpack.c.h.b16 %v2025
  %v2526 = vunpack.c.l.b16 %v2026
  %v2527 = vunpack.c.h.b16 %v2026
  %v2528 = vunpack.c.l.b16 %v2027
  %v2529 = vunpack.c.h.b16 %v2027
  %v2530 = vunpack.c.l.b16 %v2028
  %v2531 = vunpack.c.h.b16 %v2028
  %v2532 = vunpack.c.l.b16 %v2029
  %v2533 = vunpack.c.h.b16 %v2029
  %v2534 = vunpack.c.l.b16 %v2030
  %v2535 = vunpack.c.h.b16 %v2030
  %v2536 = vunpack.c.l.b16 %v2031
  %v2537 = vunpack.c.h.b16 %v2031
  %v2538 = vunpack.c.l.b16 %v2032
  %v2539 = vunpack.c.h.b16 %v2032
  %v2540 = vunpack.c.l.b16 %v2033
  %v2541 = vunpack.c.h.b16 %v2033
  %v2542 = vunpack.c.l.b16 %v2034
  %v2543 = vunpack.c.h.b16 %v2034
  %v2544 = vunpack.c.l.b16 %v2035
  %v2545 = vunpack.c.h.b16 %v2035
  %v2546 = vunpack.c.l.b16 %v2036
  %v2547 = vunpack.c.h.b16 %v2036
  %v2548 = vunpack.c.l.b16 %v2037
  %v2549 = vunpack.c.h.b16 %v2037
  %v2550 = vunpack.c.l.b16 %v2038
  %v2551 = vunpack.c.h.b16 %v2038
  %v2552 = vunpack.c.l.b16 %v2039
  %v2553 = vunpack.c.h.b16 %v2039
  %v2554 = vunpack.c.l.b16 %v2040
  %v2555 = vunpack.c.h.b16 %v2040
  %v2556 = vunpack.c.l.b16 %v2041
  %v2557 = vunpack.c.h.b16 %v2041
  %v2558 = vunpack.c.l.b16 %v2042
  %v2559 = vunpack.c.h.b16 %v2042
  %v2560 = vunpack.c.l.b16 %v2043
  %v2561 = vunpack.c.h.b16 %v2043
  %v2562 = vunpack.c.l.b16 %v2044
  %v2563 = vunpack.c.h.b16 %v2044
  %v2564 = vunpack.c.l.b16 %v2045
  %v2565 = vunpack.c.h.b16 %v2045
  %v2566 = vunpack.c.l.b16 %v2046
  %v2567 = vunpack.c.h.b16 %v2046
  %v2568 = vunpack.c.l.b16 %v2047
  %v2569 = vunpack.c.h.b16 %v2047
  %v2570 = vunpack.c.l.b16 %v2048
  %v2571 = vunpack.c.h.b16 %v2048
  %v2572 = vunpack.c.l.b16 %v2049
  %v2573 = vunpack.c.h.b16 %v2049
  %v2574 = vunpack.c.l.b16 %v2050
  %v2575 = vunpack.c.h.b16 %v2050
  %v2576 = vunpack.c.l.b16 %v2051
  %v2577 = vunpack.c.h.b16 %v2051
  %v2578 = vunpack.c.l.b16 %v2052
  %v2579 = vunpack.c.h.b16 %v2052
  %v2580 = vunpack.c.l.b16 %v2053
  %v2581 = vunpack.c.h.b16 %v2053
  %v2582 = vunpack.c.l.b16 %v2054
  %v2583 = vunpack.c.h.b16 %v2054
  %v2584 = vunpack.c.l.b16 %v2055
  %v2585 = vunpack.c.h.b16 %v2055
  %v2586 = vunpack.c.l.b16 %v2056
  %v2587 = vunpack.c.h.b16 %v2056
  %v2588 = vunpack.c.l.b16 %v2057
  %v2589 = vunpack.c.h.b16 %v2057
  %v2590 = vunpack.c.l.b16 %v2058
  %v2591 = vunpack.c.h.b16 %v2058
  %v2592 = vunpack.c.l.b16 %v2059
  %v2593 = vunpack.c.h.b16 %v2059
  %v2594 = vunpack.c.l.b16 %v2060
  %v2595 = vunpack.c.h.b16 %v2060
  %v2596 = vunpack.c.l.b16 %v2061
  %v2597 = vunpack.c.h.b16 %v2061
  %v2598 = vunpack.c.l.b16 %v2062
  %v2599 = vunpack.c.h.b16 %v2062
  %v2600 = vunpack.c.l.b16 %v2063
  %v2601 = vunpack.c.h.b16 %v2063
  %v2602 = vunpack.c.l.b16 %v2064
  %v2603 = vunpack.c.h.b16 %v2064
  %v2604 = vunpack.c.l.b16 %v2065
  %v2605 = vunpack.c.h.b16 %v2065
  %v2606 = vunpack.c.l.b16 %v2066
  %v2607 = vunpack.c.h.b16 %v2066
  %v2608 = vunpack.c.l.b16 %v2067
  %v2609 = vunpack.c.h.b16 %v2067
  %v2610 = vunpack.c.l.b16 %v2068
  %v2611 = vunpack.c.h.b16 %v2068
  %v2612 = vunpack.c.l.b16 %v2069
  %v2613 = vunpack.c.h.b16 %v2069
  %v2614 = vunpack.c.l.b16 %v2070
  %v2615 = vunpack.c.h.b16 %v2070
  %v2616 = vunpack.c.l.b16 %v2071
  %v2617 = vunpack.c.h.b16 %v2071
  %v2618 = vunpack.c.l.b16 %v2072
  %v2619 = vunpack.c.h.b16 %v2072
  %v2620 = vunpack.c.l.b16 %v2073
  %v2621 = vunpack.c.h.b16 %v2073
  %v2622 = vunpack.c.l.b16 %v2074
  %v2623 = vunpack.c.h.b16 %v2074
  %v2624 = vunpack.c.l.b16 %v2075
  %v2625 = vunpack.c.h.b16 %v2075
  %v2626 = vunpack.c.l.b16 %v2076
  %v2627 = vunpack.c.h.b16 %v2076
  %v2628 = vunpack.c.l.b16 %v2077
  %v2629 = vunpack.c.h.b16 %v2077
  %v2630 = vunpack.c.l.b16 %v2078
  %v2631 = vunpack.c.h.b16 %v2078
  %v2632 = vunpack.c.l.b16 %v2079
  %v2633 = vunpack.c.h.b16 %v2079
  %v2634 = vunpack.c.l.b16 %v2080
  %v2635 = vunpack.c.h.b16 %v2080
  %v2636 = vunpack.c.l.b16 %v2081
  %v2637 = vunpack.c.h.b16 %v2081
  %v2638 = vunpack.c.l.b16 %v2082
  %v2639 = vunpack.c.h.b16 %v2082
  %v2640 = vunpack.c.l.b16 %v2083
  %v2641 = vunpack.c.h.b16 %v2083
  %v2642 = vunpack.c.l.b16 %v2084
  %v2643 = vunpack.c.h.b16 %v2084
  %v2644 = vunpack.c.l.b16 %v2085
  %v2645 = vunpack.c.h.b16 %v2085
  %v2646 = vunpack.c.l.b16 %v2086
  %v2647 = vunpack.c.h.b16 %v2086
  %v2648 = vunpack.c.l.b16 %v2087
  %v2649 = vunpack.c.h.b16 %v2087
  %v2650 = vunpack.c.l.b16 %v2088
  %v2651 = vunpack.c.h.b16 %v2088
  %v2652 = vunpack.c.l.b16 %v2089
  %v2653 = vunpack.c.h.b16 %v2089
  %v2654 = vunpack.c.l.b16 %v2090
  %v2655 = vunpack.c.h.b16 %v2090
  %v2656 = vunpack.c.l.b16 %v2091
  %v2657 = vunpack.c.h.b16 %v2091
  %v2658 = vunpack.c.l.b16 %v2092
  %v2659 = vunpack.c.h.b16 %v2092
  %v2660 = vunpack.c.l.b16 %v2093
  %v2661 = vunpack.c.h.b16 %v2093
  %v2662 = vunpack.c.l.b16 %v2094
  %v2663 = vunpack.c.h.b16 %v2094
  %v2664 = vunpack.c.l.b16 %v2095
  %v2665 = vunpack.c.h.b16 %v2095
  %v2666 = vunpack.c.l.b16 %v2096
  %v2667 = vunpack.c.h.b16 %v2096
  %v2668 = vunpack.c.l.b16 %v2097
  %v2669 = vunpack.c.h.b16 %v2097
  %v2670 = vunpack.c.l.b16 %v2098
  %v2671 = vunpack.c.h.b16 %v2098
  %v2672 = vunpack.c.l.b16 %v2099
  %v2673 = vunpack.c.h.b16 %v2099
  %v2674 = vunpack.c.l.b16 %v2100
  %v2675 = vunpack.c.h.b16 %v2100
  %v2676 = vunpack.c.l.b16 %v2101
  %v2677 = vunpack.c.h.b16 %v2101
  %v2678 = vunpack.c.l.b16 %v2102
  %v2679 = vunpack.c.h.b16 %v2102
  %v2680 = vunpack.c.l.b16 %v2103
  %v2681 = vunpack.c.h.b16 %v2103
  %v2682 = vunpack.c.l.b16 %v2104
  %v2683 = vunpack.c.h.b16 %v2104
  %v2684 = vunpack.c.l.b16 %v2105
  %v2685 = vunpack.c.h.b16 %v2105
  %v2686 = vunpack.c.l.b16 %v2106
  %v2687 = vunpack.c.h.b16 %v2106
  %v2688 = vunpack.c.l.b16 %v2107
  %v2689 = vunpack.c.h.b16 %v2107
  %v2690 = vunpack.c.l.b16 %v2108
  %v2691 = vunpack.c.h.b16 %v2108
  %v2692 = vunpack.c.l.b16 %v2109
  %v2693 = vunpack.c.h.b16 %v2109
  %v2694 = vunpack.c.l.b16 %v2110
  %v2695 = vunpack.c.h.b16 %v2110
  %v2696 = vunpack.c.l.b16 %v2111
  %v2697 = vunpack.c.h.b16 %v2111
  %v2698 = vunpack.c.l.b16 %v2112
  %v2699 = vunpack.c.h.b16 %v2112
  %v2700 = vunpack.c.l.b16 %v2113
  %v2701 = vunpack.c.h.b16 %v2113
  %v2702 = vunpack.c.l.b16 %v2114
  %v2703 = vunpack.c.h.b16 %v2114
  %v2704 = vunpack.c.l.b16 %v2115
  %v2705 = vunpack.c.h.b16 %v2115
  %v2706 = vunpack.c.l.b16 %v2116
  %v2707 = vunpack.c.h.b16 %v2116
  %v2708 = vunpack.c.l.b16 %v2117
  %v2709 = vunpack.c.h.b16 %v2117
  %v2710 = vunpack.c.l.b16 %v2118
  %v2711 = vunpack.c.h.b16 %v2118
  %v2712 = vunpack.c.l.b16 %v2119
  %v2713 = vunpack.c.h.b16 %v2119
  %v2714 = vunpack.c.l.b16 %v2120
  %v2715 = vunpack.c.h.b16 %v2120
  %v2716 = vunpack.c.l.b16 %v2121
  %v2717 = vunpack.c.h.b16 %v2121
  %v2718 = vunpack.c.l.b16 %v2122
  %v2719 = vunpack.c.h.b16 %v2122
  %v2720 = vunpack.c.l.b16 %v2123
  %v2721 = vunpack.c.h.b16 %v2123
  %v2722 = vunpack.c.l.b16 %v2124
  %v2723 = vunpack.c.h.b16 %v2124
  %v2724 = vunpack.c.l.b16 %v2125
  %v2725 = vunpack.c.h.b16 %v2125
  %v2726 = vunpack.c.l.b16 %v2126
  %v2727 = vunpack.c.h.b16 %v2126
  %v2728 = vunpack.c.l.b16 %v2127
  %v2729 = vunpack.c.h.b16 %v2127
  %v2730 = vunpack.c.l.b16 %v2128
  %v2731 = vunpack.c.h.b16 %v2128
  %v2732 = vunpack.c.l.b16 %v2129
  %v2733 = vunpack.c.h.b16 %v2129
  %v2734 = vunpack.c.l.b16 %v2130
  %v2735 = vunpack.c.h.b16 %v2130
  %v2736 = vunpack.c.l.b16 %v2131
  %v2737 = vunpack.c.h.b16 %v2131
  %v2738 = vunpack.c.l.b16 %v2132
  %v2739 = vunpack.c.h.b16 %v2132
  %v2740 = vunpack.c.l.b16 %v2133
  %v2741 = vunpack.c.h.b16 %v2133
  %v2742 = vunpack.c.l.b16 %v2134
  %v2743 = vunpack.c.h.b16 %v2134
  %v2744 = vunpack.c.l.b16 %v2135
  %v2745 = vunpack.c.h.b16 %v2135
  %v2746 = vunpack.c.l.b16 %v2136
  %v2747 = vunpack.c.h.b16 %v2136
  %v2748 = vunpack.c.l.b16 %v2137
  %v2749 = vunpack.c.h.b16 %v2137
  %v2750 = vpack.c.b16 %v2352, %v2350
  %v2751 = vpack.c.b16 %v2353, %v2351
  %v2752 = vpack.c.b16 %v2356, %v2354
  %v2753 = vpack.c.b16 %v2357, %v2355
  %v2754 = vpack.c.b16 %v2360, %v2358
  %v2755 = vpack.c.b16 %v2361, %v2359
  %v2756 = vpack.c.b16 %v2364, %v2362
  %v2757 = vpack.c.b16 %v2365, %v2363
  %v2758 = vpack.c.b16 %v2368, %v2366
  %v2759 = vpack.c.b16 %v2369, %v2367
  %v2760 = vpack.c.b16 %v2372, %v2370
  %v2761 = vpack.c.b16 %v2373, %v2371
  %v2762 = vpack.c.b16 %v2376, %v2374
  %v2763 = vpack.c.b16 %v2377, %v2375
  %v2764 = vpack.c.b16 %v2380, %v2378
  %v2765 = vpack.c.b16 %v2381, %v2379
  %v2766 = vpack.c.b16 %v2384, %v2382
  %v2767 = vpack.c.b16 %v2385, %v2383
  %v2768 = vpack.c.b16 %v2388, %v2386
  %v2769 = vpack.c.b16 %v2389, %v2387
  %v2770 = vpack.c.b16 %v2392, %v2390
  %v2771 = vpack.c.b16 %v2393, %v2391
  %v2772 = vpack.c.b16 %v2396, %v2394
  %v2773 = vpack.c.b16 %v2397, %v2395
  %v2774 = vpack.c.b16 %v2400, %v2398
  %v2775 = vpack.c.b16 %v2401, %v2399
  %v2776 = vpack.c.b16 %v2404, %v2402
  %v2777 = vpack.c.b16 %v2405, %v2403
  %v2778 = vpack.c.b16 %v2408, %v2406
  %v2779 = vpack.c.b16 %v2409, %v2407
  %v2780 = vpack.c.b16 %v2412, %v2410
  %v2781 = vpack.c.b16 %v2413, %v2411
  %v2782 = vpack.c.b16 %v2416, %v2414
  %v2783 = vpack.c.b16 %v2417, %v2415
  %v2784 = vpack.c.b16 %v2420, %v2418
  %v2785 = vpack.c.b16 %v2421, %v2419
  %v2786 = vpack.c.b16 %v2424, %v2422
  %v2787 = vpack.c.b16 %v2425, %v2423
  %v2788 = vpack.c.b16 %v2428, %v2426
  %v2789 = vpack.c.b16 %v2429, %v2427
  %v2790 = vpack.c.b16 %v2432, %v2430
  %v2791 = vpack.c.b16 %v2433, %v2431
  %v2792 = vpack.c.b16 %v2436, %v2434
  %v2793 = vpack.c.b16 %v2437, %v2435
  %v2794 = vpack.c.b16 %v2440, %v2438
  %v2795 = vpack.c.b16 %v2441, %v2439
  %v2796 = vpack.c.b16 %v2444, %v2442
  %v2797 = vpack.c.b16 %v2445, %v2443
  %v2798 = vpack.c.b16 %v2448, %v2446
  %v2799 = vpack.c.b16 %v2449, %v2447
  %v2800 = vpack.c.b16 %v2452, %v2450
  %v2801 = vpack.c.b16 %v2453, %v2451
  %v2802 = vpack.c.b16 %v2456, %v2454
  %v2803 = vpack.c.b16 %v2457, %v2455
  %v2804 = vpack.c.b16 %v2460, %v2458
  %v2805 = vpack.c.b16 %v2461, %v2459
  %v2806 = vpack.c.b16 %v2464, %v2462
  %v2807 = vpack.c.b16 %v2465, %v2463
  %v2808 = vpack.c.b16 %v2468, %v2466
  %v2809 = vpack.c.b16 %v2469, %v2467
  %v2810 = vpack.c.b16 %v2472, %v2470
  %v2811 = vpack.c.b16 %v2473, %v2471
  %v2812 = vpack.c.b16 %v2476, %v2474
  %v2813 = vpack.c.b16 %v2477, %v2475
  %v2814 = vpack.c.b16 %v2480, %v2478
  %v2815 = vpack.c.b16 %v2481, %v2479
  %v2816 = vpack.c.b16 %v2484, %v2482
  %v2817 = vpack.c.b16 %v2485, %v2483
  %v2818 = vpack.c.b16 %v2488, %v2486
  %v2819 = vpack.c.b16 %v2489, %v2487
  %v2820 = vpack.c.b16 %v2492, %v2490
  %v2821 = vpack.c.b16 %v2493, %v2491
  %v2822 = vpack.c.b16 %v2496, %v2494
  %v2823 = vpack.c.b16 %v2497, %v2495
  %v2824 = vpack.c.b16 %v2500, %v2498
  %v2825 = vpack.c.b16 %v2501, %v2499
  %v2826 = vpack.c.b16 %v2504, %v2502
  %v2827 = vpack.c.b16 %v2505, %v2503
  %v2828 = vpack.c.b16 %v2508, %v2506
  %v2829 = vpack.c.b16 %v2509, %v2507
  %v2830 = vpack.c.b16 %v2512, %v2510
  %v2831 = vpack.c.b16 %v2513, %v2511
  %v2832 = vpack.c.b16 %v2516, %v2514
  %v2833 = vpack.c.b16 %v2517, %v2515
  %v2834 = vpack.c.b16 %v2520, %v2518
  %v2835 = vpack.c.b16 %v2521, %v2519
  %v2836 = vpack.c.b16 %v2524, %v2522
  %v2837 = vpack.c.b16 %v2525, %v2523
  %v2838 = vpack.c.b16 %v2528, %v2526
  %v2839 = vpack.c.b16 %v2529, %v2527
  %v2840 = vpack.c.b16 %v2532, %v2530
  %v2841 = vpack.c.b16 %v2533, %v2531
  %v2842 = vpack.c.b16 %v2536, %v2534
  %v2843 = vpack.c.b16 %v2537, %v2535
  %v2844 = vpack.c.b16 %v2540, %v2538
  %v2845 = vpack.c.b16 %v2541, %v2539
  %v2846 = vpack.c.b16 %v2544, %v2542
  %v2847 = vpack.c.b16 %v2545, %v2543
  %v2848 = vpack.c.b16 %v2548, %v2546
  %v2849 = vpack.c.b16 %v2549, %v2547
  %v2850 = vpack.c.b16 %v2552, %v2550
  %v2851 = vpack.c.b16 %v2553, %v2551
  %v2852 = vpack.c.b16 %v2556, %v2554
  %v2853 = vpack.c.b16 %v2557, %v2555
  %v2854 = vpack.c.b16 %v2560, %v2558
  %v2855 = vpack.c.b16 %v2561, %v2559
  %v2856 = vpack.c.b16 %v2564, %v2562
  %v2857 = vpack.c.b16 %v2565, %v2563
  %v2858 = vpack.c.b16 %v2568, %v2566
  %v2859 = vpack.c.b16 %v2569, %v2567
  %v2860 = vpack.c.b16 %v2572, %v2570
  %v2861 = vpack.c.b16 %v2573, %v2571
  %v2862 = vpack.c.b16 %v2576, %v2574
  %v2863 = vpack.c.b16 %v2577, %v2575
  %v2864 = vpack.c.b16 %v2580, %v2578
  %v2865 = vpack.c.b16 %v2581, %v2579
  %v2866 = vpack.c.b16 %v2584, %v2582
  %v2867 = vpack.c.b16 %v2585, %v2583
  %v2868 = vpack.c.b16 %v2588, %v2586
  %v2869 = vpack.c.b16 %v2589, %v2587
  %v2870 = vpack.c.b16 %v2592, %v2590
  %v2871 = vpack.c.b16 %v2593, %v2591
  %v2872 = vpack.c.b16 %v2596, %v2594
  %v2873 = vpack.c.b16 %v2597, %v2595
  %v2874 = vpack.c.b16 %v2600, %v2598
  %v2875 = vpack.c.b16 %v2601, %v2599
  %v2876 = vpack.c.b16 %v2604, %v2602
  %v2877 = vpack.c.b16 %v2605, %v2603
  %v2878 = vpack.c.b16 %v2608, %v2606
  %v2879 = vpack.c.b16 %v2609, %v2607
  %v2880 = vpack.c.b16 %v2612, %v2610
  %v2881 = vpack.c.b16 %v2613, %v2611
  %v2882 = vpack.c.b16 %v2616, %v2614
  %v2883 = vpack.c.b16 %v2617, %v2615
  %v2884 = vpack.c.b16 %v2620, %v2618
  %v2885 = vpack.c.b16 %v2621, %v2619
  %v2886 = vpack.c.b16 %v2624, %v2622
  %v2887 = vpack.c.b16 %v2625, %v2623
  %v2888 = vpack.c.b16 %v2628, %v2626
  %v2889 = vpack.c.b16 %v2629, %v2627
  %v2890 = vpack.c.b16 %v2632, %v2630
  %v2891 = vpack.c.b16 %v2633, %v2631
  %v2892 = vpack.c.b16 %v2636, %v2634
  %v2893 = vpack.c.b16 %v2637, %v2635
  %v2894 = vpack.c.b16 %v2640, %v2638
  %v2895 = vpack.c.b16 %v2641, %v2639
  %v2896 = vpack.c.b16 %v2644, %v2642
  %v2897 = vpack.c.b16 %v2645, %v2643
  %v2898 = vpack.c.b16 %v2648, %v2646
  %v2899 = vpack.c.b16 %v2649, %v2647
  %v2900 = vpack.c.b16 %v2652, %v2650
  %v2901 = vpack.c.b16 %v2653, %v2651
  %v2902 = vpack.c.b16 %v2656, %v2654
  %v2903 = vpack.c.b16 %v2657, %v2655
  %v2904 = vpack.c.b16 %v2660, %v2658
  %v2905 = vpack.c.b16 %v2661, %v2659
  %v2906 = vpack.c.b16 %v2664, %v2662
  %v2907 = vpack.c.b16 %v2665, %v2663
  %v2908 = vpack.c.b16 %v2668, %v2666
  %v2909 = vpack.c.b16 %v2669, %v2667
  %v2910 = vpack.c.b16 %v2672, %v2670
  %v2911 = vpack.c.b16 %v2673, %v2671
  %v2912 = vpack.c.b16 %v2676, %v2674
  %v2913 = vpack.c.b16 %v2677, %v2675
  %v2914 = vpack.c.b16 %v2680, %v2678
  %v2915 = vpack.c.b16 %v2681, %v2679
  %v2916 = vpack.c.b16 %v2684, %v2682
  %v2917 = vpack.c.b16 %v2685, %v2683
  %v2918 = vpack.c.b16 %v2688, %v2686
  %v2919 = vpack.c.b16 %v2689, %v2687
  %v2920 = vpack.c.b16 %v2692, %v2690
  %v2921 = vpack.c.b16 %v2693, %v2691
  %v2922 = vpack.c.b16 %v2696, %v2694
  %v2923 = vpack.c.b16 %v2697, %v2695
  %v2924 = vpack.c.b16 %v2700, %v2698
  %v2925 = vpack.c.b16 %v2701, %v2699
  %v2926 = vpack.c.b16 %v2704, %v2702
  %v2927 = vpack.c.b16 %v2705, %v2703
  %v2928 = vpack.c.b16 %v2708, %v2706
  %v2929 = vpack.c.b16 %v2709, %v2707
  %v2930 = vpack.c.b16 %v2712, %v2710
  %v2931 = vpack.c.b16 %v2713, %v2711
  %v2932 = vpack.c.b16 %v2716, %v2714
  %v2933 = vpack.c.b16 %v2717, %v2715
  %v2934 = vpack.c.b16 %v2720, %v2718
  %v2935 = vpack.c.b16 %v2721, %v2719
  %v2936 = vpack.c.b16 %v2724, %v2722
  %v2937 = vpack.c.b16 %v2725, %v2723
  %v2938 = vpack.c.b16 %v2728, %v2726
  %v2939 = vpack.c.b16 %v2729, %v2727
  %v2940 = vpack.c.b16 %v2732, %v2730
  %v2941 = vpack.c.b16 %v2733, %v2731
  %v2942 = vpack.c.b16 %v2736, %v2734
  %v2943 = vpack.c.b16 %v2737, %v2735
  %v2944 = vpack.c.b16 %v2740, %v2738
  %v2945 = vpack.c.b16 %v2741, %v2739
  %v2946 = vpack.c.b16 %v2744, %v2742
  %v2947 = vpack.c.b16 %v2745, %v2743
  %v2948 = vpack.c.b16 %v2748, %v2746
  %v2949 = vpack.c.b16 %v2749, %v2747
  %vm3150 = vcmask 523264
  %v3152 = vsel %vm3150, %v1937, 0
  %3154 = vmatprep.subr.bf16.mxu0 %v2751
  %3155 = vmatpush1.bf16.msra.mxu0 %v2750
  %3156 = vmatprep.subr.bf16.mxu0 %v2753
  %3157 = vmatpush1.bf16.msra.mxu0 %v2752
  %3158 = vmatprep.subr.bf16.mxu0 %v2755
  %3159 = vmatpush1.bf16.msra.mxu0 %v2754
  %3160 = vmatprep.subr.bf16.mxu0 %v2757
  %3161 = vmatpush1.bf16.msra.mxu0 %v2756
  %3162 = vmatprep.subr.bf16.mxu0 %v2759
  %3163 = vmatpush1.bf16.msra.mxu0 %v2758
  %3164 = vmatprep.subr.bf16.mxu0 %v2761
  %3165 = vmatpush1.bf16.msra.mxu0 %v2760
  %3166 = vmatprep.subr.bf16.mxu0 %v2763
  %3167 = vmatpush1.bf16.msra.mxu0 %v2762
  %3168 = vmatprep.subr.bf16.mxu0 %v2765
  %3169 = vmatpush1.bf16.msra.mxu0 %v2764
  %3170 = vmatprep.subr.bf16.mxu0 %v2767
  %3171 = vmatpush1.bf16.msra.mxu0 %v2766
  %3172 = vmatprep.subr.bf16.mxu0 %v2769
  %3173 = vmatpush1.bf16.msra.mxu0 %v2768
  %3174 = vmatprep.subr.bf16.mxu0 %v2771
  %3175 = vmatpush1.bf16.msra.mxu0 %v2770
  %3176 = vmatprep.subr.bf16.mxu0 %v2773
  %3177 = vmatpush1.bf16.msra.mxu0 %v2772
  %3178 = vmatprep.subr.bf16.mxu0 %v2775
  %3179 = vmatpush1.bf16.msra.mxu0 %v2774
  %3180 = vmatprep.subr.bf16.mxu0 %v2777
  %3181 = vmatpush1.bf16.msra.mxu0 %v2776
  %3182 = vmatprep.subr.bf16.mxu0 %v2779
  %3183 = vmatpush1.bf16.msra.mxu0 %v2778
  %3184 = vmatprep.subr.bf16.mxu0 %v2781
  %3185 = vmatpush1.bf16.msra.mxu0 %v2780
  %3186 = vmatprep.mubr.bf16.mxu0 %v1926
  %3187 = vmatmul.mubr.bf16.gmra.mrb[0].mxu0 %v1925
  %v3188 = vpop.f32.mrb[0].mxu0
  %v3189 = vadd.f32 %v2143, %v3188
  %v3190 = vpop.f32.mrb[0].mxu0
  %v3191 = vadd.f32 %v2147, %v3190
  %v3192 = vpop.f32.mrb[0].mxu0
  %v3193 = vpop.f32.mrb[0].mxu0
  %3194 = vdwg.mxu0
  %3195 = vmatprep.subr.bf16.mxu0 %v2783
  %3196 = vmatpush1.bf16.msra.mxu0 %v2782
  %3197 = vmatprep.subr.bf16.mxu0 %v2785
  %3198 = vmatpush1.bf16.msra.mxu0 %v2784
  %3199 = vmatprep.subr.bf16.mxu0 %v2787
  %3200 = vmatpush1.bf16.msra.mxu0 %v2786
  %3201 = vmatprep.subr.bf16.mxu0 %v2789
  %3202 = vmatpush1.bf16.msra.mxu0 %v2788
  %3203 = vmatprep.subr.bf16.mxu0 %v2791
  %3204 = vmatpush1.bf16.msra.mxu0 %v2790
  %3205 = vmatprep.subr.bf16.mxu0 %v2793
  %3206 = vmatpush1.bf16.msra.mxu0 %v2792
  %3207 = vmatprep.subr.bf16.mxu0 %v2795
  %3208 = vmatpush1.bf16.msra.mxu0 %v2794
  %3209 = vmatprep.subr.bf16.mxu0 %v2797
  %3210 = vmatpush1.bf16.msra.mxu0 %v2796
  %3211 = vmatprep.subr.bf16.mxu0 %v2799
  %3212 = vmatpush1.bf16.msra.mxu0 %v2798
  %3213 = vmatprep.subr.bf16.mxu0 %v2801
  %3214 = vmatpush1.bf16.msra.mxu0 %v2800
  %3215 = vmatprep.subr.bf16.mxu0 %v2803
  %3216 = vmatpush1.bf16.msra.mxu0 %v2802
  %3217 = vmatprep.subr.bf16.mxu0 %v2805
  %3218 = vmatpush1.bf16.msra.mxu0 %v2804
  %3219 = vmatprep.subr.bf16.mxu0 %v2807
  %3220 = vmatpush1.bf16.msra.mxu0 %v2806
  %3221 = vmatprep.subr.bf16.mxu0 %v2809
  %3222 = vmatpush1.bf16.msra.mxu0 %v2808
  %3223 = vmatprep.subr.bf16.mxu0 %v2811
  %3224 = vmatpush1.bf16.msra.mxu0 %v2810
  %3225 = vmatprep.subr.bf16.mxu0 %v2813
  %3226 = vmatpush1.bf16.msra.mxu0 %v2812
  %3227 = vmatprep.mubr.bf16.mxu0 %v1928
  %3228 = vmatmul.mubr.bf16.gmra.mrb[0].mxu0 %v1927
  %v3229 = vpop.f32.mrb[0].mxu0
  %v3230 = vadd.f32 %v3189, %v3229
  %v3231 = vpop.f32.mrb[0].mxu0
  %v3232 = vadd.f32 %v3191, %v3231
  %v3233 = vpop.f32.mrb[0].mxu0
  %v3234 = vpop.f32.mrb[0].mxu0
  %3235 = vdwg.mxu0
  %3236 = vmatprep.subr.bf16.mxu0 %v2815
  %3237 = vmatpush1.bf16.msra.mxu0 %v2814
  %3238 = vmatprep.subr.bf16.mxu0 %v2817
  %3239 = vmatpush1.bf16.msra.mxu0 %v2816
  %3240 = vmatprep.subr.bf16.mxu0 %v2819
  %3241 = vmatpush1.bf16.msra.mxu0 %v2818
  %3242 = vmatprep.subr.bf16.mxu0 %v2821
  %3243 = vmatpush1.bf16.msra.mxu0 %v2820
  %3244 = vmatprep.subr.bf16.mxu0 %v2823
  %3245 = vmatpush1.bf16.msra.mxu0 %v2822
  %3246 = vmatprep.subr.bf16.mxu0 %v2825
  %3247 = vmatpush1.bf16.msra.mxu0 %v2824
  %3248 = vmatprep.subr.bf16.mxu0 %v2827
  %3249 = vmatpush1.bf16.msra.mxu0 %v2826
  %3250 = vmatprep.subr.bf16.mxu0 %v2829
  %3251 = vmatpush1.bf16.msra.mxu0 %v2828
  %3252 = vmatprep.subr.bf16.mxu0 %v2831
  %3253 = vmatpush1.bf16.msra.mxu0 %v2830
  %3254 = vmatprep.subr.bf16.mxu0 %v2833
  %3255 = vmatpush1.bf16.msra.mxu0 %v2832
  %3256 = vmatprep.subr.bf16.mxu0 %v2835
  %3257 = vmatpush1.bf16.msra.mxu0 %v2834
  %3258 = vmatprep.subr.bf16.mxu0 %v2837
  %3259 = vmatpush1.bf16.msra.mxu0 %v2836
  %3260 = vmatprep.subr.bf16.mxu0 %v2839
  %3261 = vmatpush1.bf16.msra.mxu0 %v2838
  %3262 = vmatprep.subr.bf16.mxu0 %v2841
  %3263 = vmatpush1.bf16.msra.mxu0 %v2840
  %3264 = vmatprep.subr.bf16.mxu0 %v2843
  %3265 = vmatpush1.bf16.msra.mxu0 %v2842
  %3266 = vmatprep.subr.bf16.mxu0 %v2845
  %3267 = vmatpush1.bf16.msra.mxu0 %v2844
  %3268 = vmatprep.mubr.bf16.mxu0 %v1930
  %3269 = vmatmul.mubr.bf16.gmra.mrb[0].mxu0 %v1929
  %v3270 = vpop.f32.mrb[0].mxu0
  %v3271 = vadd.f32 %v3230, %v3270
  %v3272 = vpop.f32.mrb[0].mxu0
  %v3273 = vadd.f32 %v3232, %v3272
  %v3274 = vpop.f32.mrb[0].mxu0
  %v3275 = vpop.f32.mrb[0].mxu0
  %3276 = vdwg.mxu0
  %3277 = vmatprep.subr.bf16.mxu0 %v2847
  %3278 = vmatpush1.bf16.msra.mxu0 %v2846
  %3279 = vmatprep.subr.bf16.mxu0 %v2849
  %3280 = vmatpush1.bf16.msra.mxu0 %v2848
  %3281 = vmatprep.subr.bf16.mxu0 %v2851
  %3282 = vmatpush1.bf16.msra.mxu0 %v2850
  %3283 = vmatprep.subr.bf16.mxu0 %v2853
  %3284 = vmatpush1.bf16.msra.mxu0 %v2852
  %3285 = vmatprep.subr.bf16.mxu0 %v2855
  %3286 = vmatpush1.bf16.msra.mxu0 %v2854
  %3287 = vmatprep.subr.bf16.mxu0 %v2857
  %3288 = vmatpush1.bf16.msra.mxu0 %v2856
  %3289 = vmatprep.subr.bf16.mxu0 %v2859
  %3290 = vmatpush1.bf16.msra.mxu0 %v2858
  %3291 = vmatprep.subr.bf16.mxu0 %v2861
  %3292 = vmatpush1.bf16.msra.mxu0 %v2860
  %3293 = vmatprep.subr.bf16.mxu0 %v2863
  %3294 = vmatpush1.bf16.msra.mxu0 %v2862
  %3295 = vmatprep.subr.bf16.mxu0 %v2865
  %3296 = vmatpush1.bf16.msra.mxu0 %v2864
  %3297 = vmatprep.subr.bf16.mxu0 %v2867
  %3298 = vmatpush1.bf16.msra.mxu0 %v2866
  %3299 = vmatprep.subr.bf16.mxu0 %v2869
  %3300 = vmatpush1.bf16.msra.mxu0 %v2868
  %3301 = vmatprep.subr.bf16.mxu0 %v2871
  %3302 = vmatpush1.bf16.msra.mxu0 %v2870
  %3303 = vmatprep.subr.bf16.mxu0 %v2873
  %3304 = vmatpush1.bf16.msra.mxu0 %v2872
  %3305 = vmatprep.subr.bf16.mxu0 %v2875
  %3306 = vmatpush1.bf16.msra.mxu0 %v2874
  %3307 = vmatprep.subr.bf16.mxu0 %v2877
  %3308 = vmatpush1.bf16.msra.mxu0 %v2876
  %3309 = vmatprep.mubr.bf16.mxu0 %v1932
  %3310 = vmatmul.mubr.bf16.gmra.mrb[0].mxu0 %v1931
  %v3311 = vpop.f32.mrb[0].mxu0
  %v3312 = vadd.f32 %v3271, %v3311
  %v3313 = vpop.f32.mrb[0].mxu0
  %v3314 = vadd.f32 %v3273, %v3313
  %v3315 = vpop.f32.mrb[0].mxu0
  %v3316 = vpop.f32.mrb[0].mxu0
  %3317 = vdwg.mxu0
  %3318 = vmatprep.subr.bf16.mxu0 %v2879
  %3319 = vmatpush1.bf16.msra.mxu0 %v2878
  %3320 = vmatprep.subr.bf16.mxu0 %v2881
  %3321 = vmatpush1.bf16.msra.mxu0 %v2880
  %3322 = vmatprep.subr.bf16.mxu0 %v2883
  %3323 = vmatpush1.bf16.msra.mxu0 %v2882
  %3324 = vmatprep.subr.bf16.mxu0 %v2885
  %3325 = vmatpush1.bf16.msra.mxu0 %v2884
  %3326 = vmatprep.subr.bf16.mxu0 %v2887
  %3327 = vmatpush1.bf16.msra.mxu0 %v2886
  %3328 = vmatprep.subr.bf16.mxu0 %v2889
  %3329 = vmatpush1.bf16.msra.mxu0 %v2888
  %3330 = vmatprep.subr.bf16.mxu0 %v2891
  %3331 = vmatpush1.bf16.msra.mxu0 %v2890
  %3332 = vmatprep.subr.bf16.mxu0 %v2893
  %3333 = vmatpush1.bf16.msra.mxu0 %v2892
  %3334 = vmatprep.subr.bf16.mxu0 %v2895
  %3335 = vmatpush1.bf16.msra.mxu0 %v2894
  %3336 = vmatprep.subr.bf16.mxu0 %v2897
  %3337 = vmatpush1.bf16.msra.mxu0 %v2896
  %3338 = vmatprep.subr.bf16.mxu0 %v2899
  %3339 = vmatpush1.bf16.msra.mxu0 %v2898
  %3340 = vmatprep.subr.bf16.mxu0 %v2901
  %3341 = vmatpush1.bf16.msra.mxu0 %v2900
  %3342 = vmatprep.subr.bf16.mxu0 %v2903
  %3343 = vmatpush1.bf16.msra.mxu0 %v2902
  %3344 = vmatprep.subr.bf16.mxu0 %v2905
  %3345 = vmatpush1.bf16.msra.mxu0 %v2904
  %3346 = vmatprep.subr.bf16.mxu0 %v2907
  %3347 = vmatpush1.bf16.msra.mxu0 %v2906
  %3348 = vmatprep.subr.bf16.mxu0 %v2909
  %3349 = vmatpush1.bf16.msra.mxu0 %v2908
  %3350 = vmatprep.mubr.bf16.mxu0 %v1934
  %3351 = vmatmul.mubr.bf16.gmra.mrb[0].mxu0 %v1933
  %v3352 = vpop.f32.mrb[0].mxu0
  %v3353 = vadd.f32 %v3312, %v3352
  %v3354 = vpop.f32.mrb[0].mxu0
  %v3355 = vadd.f32 %v3314, %v3354
  %v3356 = vpop.f32.mrb[0].mxu0
  %v3357 = vpop.f32.mrb[0].mxu0
  %3358 = vdwg.mxu0
  %3359 = vmatprep.subr.bf16.mxu0 %v2911
  %3360 = vmatpush1.bf16.msra.mxu0 %v2910
  %3361 = vmatprep.subr.bf16.mxu0 %v2913
  %3362 = vmatpush1.bf16.msra.mxu0 %v2912
  %3363 = vmatprep.subr.bf16.mxu0 %v2915
  %3364 = vmatpush1.bf16.msra.mxu0 %v2914
  %3365 = vmatprep.subr.bf16.mxu0 %v2917
  %3366 = vmatpush1.bf16.msra.mxu0 %v2916
  %3367 = vmatprep.subr.bf16.mxu0 %v2919
  %3368 = vmatpush1.bf16.msra.mxu0 %v2918
  %3369 = vmatprep.subr.bf16.mxu0 %v2921
  %3370 = vmatpush1.bf16.msra.mxu0 %v2920
  %3371 = vmatprep.subr.bf16.mxu0 %v2923
  %3372 = vmatpush1.bf16.msra.mxu0 %v2922
  %3373 = vmatprep.subr.bf16.mxu0 %v2925
  %3374 = vmatpush1.bf16.msra.mxu0 %v2924
  %3375 = vmatprep.subr.bf16.mxu0 %v2927
  %3376 = vmatpush1.bf16.msra.mxu0 %v2926
  %3377 = vmatprep.subr.bf16.mxu0 %v2929
  %3378 = vmatpush1.bf16.msra.mxu0 %v2928
  %3379 = vmatprep.subr.bf16.mxu0 %v2931
  %3380 = vmatpush1.bf16.msra.mxu0 %v2930
  %3381 = vmatprep.subr.bf16.mxu0 %v2933
  %3382 = vmatpush1.bf16.msra.mxu0 %v2932
  %3383 = vmatprep.subr.bf16.mxu0 %v2935
  %3384 = vmatpush1.bf16.msra.mxu0 %v2934
  %3385 = vmatprep.subr.bf16.mxu0 %v2937
  %3386 = vmatpush1.bf16.msra.mxu0 %v2936
  %3387 = vmatprep.subr.bf16.mxu0 %v2939
  %3388 = vmatpush1.bf16.msra.mxu0 %v2938
  %3389 = vmatprep.subr.bf16.mxu0 %v2941
  %3390 = vmatpush1.bf16.msra.mxu0 %v2940
  %3391 = vmatprep.mubr.bf16.mxu0 %v1936
  %3392 = vmatmul.mubr.bf16.gmra.mrb[0].mxu0 %v1935
  %v3393 = vpop.f32.mrb[0].mxu0
  %v3394 = vadd.f32 %v3353, %v3393
  %v3395 = vpop.f32.mrb[0].mxu0
  %v3396 = vadd.f32 %v3355, %v3395
  %v3397 = vpop.f32.mrb[0].mxu0
  %v3398 = vpop.f32.mrb[0].mxu0
  %3399 = vdwg.mxu0
  %3400 = vmatprep.subr.bf16.mxu0 %v2943
  %3401 = vmatpush1.bf16.msra.mxu0 %v2942
  %3402 = vmatprep.subr.bf16.mxu0 %v2945
  %3403 = vmatpush1.bf16.msra.mxu0 %v2944
  %3404 = vmatprep.subr.bf16.mxu0 %v2947
  %3405 = vmatpush1.bf16.msra.mxu0 %v2946
  %3406 = vmatprep.subr.bf16.mxu0 %v2949
  %3407 = vmatpush1.bf16.msra.mxu0 %v2948
  %3408 = vmatprep.subr.bf16.mxu0 0
  %3409 = vmatpush1.bf16.msra.mxu0 0
  %3410 = vmatprep.subr.bf16.mxu0 0
  %3411 = vmatpush1.bf16.msra.mxu0 0
  %3412 = vmatprep.subr.bf16.mxu0 0
  %3413 = vmatpush1.bf16.msra.mxu0 0
  %3414 = vmatprep.subr.bf16.mxu0 0
  %3415 = vmatpush1.bf16.msra.mxu0 0
  %3416 = vmatprep.subr.bf16.mxu0 0
  %3417 = vmatpush1.bf16.msra.mxu0 0
  %3418 = vmatprep.subr.bf16.mxu0 0
  %3419 = vmatpush1.bf16.msra.mxu0 0
  %3420 = vmatprep.subr.bf16.mxu0 0
  %3421 = vmatpush1.bf16.msra.mxu0 0
  %3422 = vmatprep.subr.bf16.mxu0 0
  %3423 = vmatpush1.bf16.msra.mxu0 0
  %3424 = vmatprep.subr.bf16.mxu0 0
  %3425 = vmatpush1.bf16.msra.mxu0 0
  %3426 = vmatprep.subr.bf16.mxu0 0
  %3427 = vmatpush1.bf16.msra.mxu0 0
  %3428 = vmatprep.subr.bf16.mxu0 0
  %3429 = vmatpush1.bf16.msra.mxu0 0
  %3430 = vmatprep.subr.bf16.mxu0 0
  %3431 = vmatpush1.bf16.msra.mxu0 0
  %3432 = vmatprep.mubr.bf16.mxu0 0
  %3433 = vmatmul.mubr.bf16.gmra.mrb[0].mxu0 %v3152
  %v3434 = vpop.f32.mrb[0].mxu0
  %v3435 = vadd.f32 %v3394, %v3434
  %v3436 = vpop.f32.mrb[0].mxu0
  %v3437 = vadd.f32 %v3396, %v3436
  %v3438 = vpop.f32.mrb[0].mxu0
  %v3439 = vpop.f32.mrb[0].mxu0
  %3440 = vdwg.mxu0
  %v3441 = vtanh.pop %v3435
  %v3442 = vtanh.pop %v3437
  %v3443 = vld [vmem:[%s6] sm:$0x3]
  %v3445 = vlaneseq
  %v3446 = vshrl.u32 %v3445, 7
  %v3447 = vsub.s32 0, %v3446
  %v3448 = vrot.slane %v3443, %v3447
  %v3449 = vlaneseq
  %v3450 = vshrl.u32 %v3449, 7
  %v3451 = vsub.s32 1, %v3450
  %v3452 = vrot.slane %v3443, %v3451
  %v3455 = vmul.f32 %v3441, %v3448
  %v3456 = vmul.f32 %v3442, %v3452
  %vm3457 = vcmask 1041408
  %v3458 = vsel %vm3457, %v3455, 0.0
  %v3459 = vsel %vm3457, %v3456, 0.0
  %v3460 = vadd.f32 %v3458, %v3459
  %3461 = vadd.xlane.f32.xlu0 %v3460
  %v3462 = vpop.xlane.xlu0 %3461
  %v3463 = vld [vmem:[%s7] sm:$0x3]
  %v3465 = vlaneseq
  %v3466 = vshrl.u32 %v3465, 7
  %v3467 = vsub.s32 0, %v3466
  %v3468 = vrot.slane %v3463, %v3467
  %v3469 = vlaneseq
  %v3470 = vshrl.u32 %v3469, 7
  %v3471 = vsub.s32 1, %v3470
  %v3472 = vrot.slane %v3463, %v3471
  %v3475 = vmul.f32 %v1844, %v3468
  %v3476 = vmul.f32 %v1845, %v3472
  %v3477 = vsel %vm3457, %v3475, 0.0
  %v3478 = vsel %vm3457, %v3476, 0.0
  %v3479 = vadd.f32 %v3477, %v3478
  %3480 = vadd.xlane.f32.xlu0 %v3479
  %v3481 = vpop.xlane.xlu0 %3480
  %v3482 = vadd.f32 %v3462, %v3481
  %v3483 = vld [vmem:[#allocation2] sm:$0x1]
  %v3485 = vlaneseq
  %v3486 = vshrl.u32 %v3485, 7
  %v3487 = vsub.s32 0, %v3486
  %v3488 = vrot.slane %v3483, %v3487
  %v3490 = vadd.f32 %v3482, %v3488
  %v3491 = vxor.u32 %v3490, 2147483648
  %v3492 = vmul.f32 %v3491, 1.442695
  %v3493 = vpow.pop %v3492
  %v3494 = vadd.f32 %v3493, 1.0
  %v3495 = vrcp.pop %v3494
  %v3496 = vmul.f32 1.0, %v3495
  %vm3497 = vcmask 1024
  %3498 = vst.msk [vmem:[%s9] sm:$0x3] %vm3497, %v3496
  // Predicated region
  $region38: #{seq_discriminator_forward.1} parent=0 // pred_check
    _
  $region39: #{seq_discriminator_forward.1} parent=0 // pred_check_branch
    %3500 = sbr.rel (0) target = $region41
  $region40: #{seq_discriminator_forward.1} parent=0 // pred_region
    _
  $region41: #{seq_discriminator_forward.1} parent=0 // pred_fallthru
    _
  // Predicated region
  $region42: #{seq_discriminator_forward.1} parent=0 // pred_check
    _
  $region43: #{seq_discriminator_forward.1} parent=0 // pred_check_branch
    %3502 = sbr.rel (0) target = $region45
  $region44: #{seq_discriminator_forward.1} parent=0 // pred_region
    _
  $region45: #{seq_discriminator_forward.1} parent=0 // pred_fallthru
    _

</llo_original>
